<compile_context>
chip_gen: v7x
topology: tpu7x:2x2x1
jax: 0.10.0
libtpu: 0.0.40
codegen_flags: <defaults>
</compile_context>

<pallas_src>
import jax
import jax.numpy as jnp
from jax.experimental import pallas as pl
from jax.experimental.pallas import tpu as pltpu


def _cbam1d_kernel(x_ref, w1t_ref, b1_ref, w2t_ref, b2_ref, sg_ref, o_ref):
    """One grid step: a (TB, C, L) batch block -> channel gate -> spatial gate."""
    tb, c, length = x_ref.shape
    k_taps = (sg_ref.shape[0] - 3) // 2
    pad = (k_taps - 1) // 2
    inv_l = 1.0 / float(length)
    inv_c = 1.0 / float(c)

    # Resident parameters (tiny), read once per grid step.
    w1t = w1t_ref[...]                    # (C, H) = Linear(C->H).weight.T
    b1 = b1_ref[...]                      # (1, H)
    w2t = w2t_ref[...]                    # (H, C) = Linear(H->C).weight.T
    b2 = b2_ref[...]                      # (1, C)

    conv_b = sg_ref[2 * k_taps]           # SMEM scalars
    bn_scale = sg_ref[2 * k_taps + 1]
    bn_shift = sg_ref[2 * k_taps + 2]

    x = x_ref[...].astype(jnp.float32)                                    # (TB, C, L)

    # ---------------- channel gate (whole block at once) ----------------
    s_avg = jnp.sum(x, axis=-1) * inv_l                                   # (TB, C)
    s_max = jnp.max(x, axis=-1)                                           # (TB, C)
    s = jnp.concatenate([s_avg, s_max], axis=0)                           # (2*TB, C)

    # Batched excitation MLP: both squeezes of every sample in one pass.
    h = jnp.maximum(jnp.dot(s, w1t, preferred_element_type=jnp.float32) + b1, 0.0)
    e = jnp.dot(h, w2t, preferred_element_type=jnp.float32) + b2          # (2*TB, C)
    ch_gate = jax.nn.sigmoid(e[:tb] + e[tb:])                             # (TB, C)
    xg = x * ch_gate[:, :, None]                                          # (TB, C, L)

    # ---------------- spatial gate (batched over the tile) --------------
    sp_avg = jnp.sum(xg, axis=1) * inv_c                                  # (TB, L) sublane reduce
    sp_max = jnp.max(xg, axis=1)                                          # (TB, L)

    lane = jax.lax.broadcasted_iota(jnp.int32, (1, length), 1)            # hoisted

    def shifted(slab, d):
        # slab[:, l + d] with zero padding outside [0, L): one XLU roll + one
        # lane-mask select per tap (d is a static Python int).
        if d == 0:
            return slab
        rolled = pltpu.roll(slab, (-d) % length, axis=1)
        mask = (lane < (length - d)) if d > 0 else (lane >= (-d))
        return jnp.where(mask, rolled, 0.0)

    # Conv1d(2 -> 1, kernel k_taps, zero padding): 2*(k_taps) scalar-weighted taps
    # per TILE (not per sample).  Center tap needs no roll / mask.
    conv = conv_b + sg_ref[pad] * sp_avg + sg_ref[k_taps + pad] * sp_max  # (TB, L)
    for k in range(k_taps):
        d = k - pad
        if d == 0:
            continue
        conv = conv + sg_ref[k] * shifted(sp_avg, d) \
                    + sg_ref[k_taps + k] * shifted(sp_max, d)

    # ReLU -> BatchNorm1d(1) (inference affine, folded) -> sigmoid.
    sp_gate = jax.nn.sigmoid(jnp.maximum(conv, 0.0) * bn_scale + bn_shift)  # (TB, L)

    o_ref[...] = (xg * sp_gate[:, None, :]).astype(o_ref.dtype)            # (TB, C, L)


def _pick_batch_tile(batch, c, length, itemsize, target_bytes):
    """Largest divisor of `batch` whose (TB, C, L) x-block stays <= target_bytes.

    Prefers an even number of grid steps (v7x shards the 'parallel' axis over its
    2 TensorCores) as long as that costs at most a 2x smaller tile; on 1-TC chips
    (v5e/v6e) the even-step preference is harmless since blocks stay multi-MiB."""
    slab = c * length * itemsize
    divisors = [d for d in range(1, batch + 1) if batch % d == 0]
    fits = [d for d in divisors if d * slab <= target_bytes]
    if not fits:
        # TODO(synk): add an L-tiling / accumulate-over-L fallback for the case where
        # a single sample's (C, L) slab alone exceeds the VMEM budget.
        return 1
    best = max(fits)
    even = [d for d in fits if (batch // d) % 2 == 0]
    if even and max(even) * 2 >= best:
        return max(even)
    return best


def cbam1d_forward(x, w1, b1, w2, b2, conv_w, conv_b,
                   bn_gamma, bn_beta, bn_mean, bn_var, bn_eps=1e-5,
                   *, batch_tile=None, target_block_bytes=4 << 20, interpret=False):
    """Fused ConvolutionalBlockAttention1d forward.

    x: (B, C, L) f32 or bf16 (output dtype follows x; math is f32 internally).
    w1: (H, C), b1: (H,), w2: (C, H), b2: (C,)  -- PyTorch Linear layouts.
    conv_w: (1, 2, K), conv_b: (1,)             -- PyTorch Conv1d(2, 1, K) layout.
    bn_*: (1,) BatchNorm1d(1) parameters / running stats (inference mode).
    """
    B, C, L = x.shape
    H = w1.shape[0]
    K = conv_w.shape[-1]
    assert conv_w.shape == (1, 2, K) and K % 2 == 1

    if batch_tile is None:
        batch_tile = _pick_batch_tile(B, C, L, x.dtype.itemsize, target_block_bytes)
    assert B % batch_tile == 0

    f32 = jnp.float32
    w1t = w1.T.astype(f32)                      # (C, H)  row-oriented MLP operands
    w2t = w2.T.astype(f32)                      # (H, C)
    b1r = b1.reshape(1, H).astype(f32)
    b2r = b2.reshape(1, C).astype(f32)
    bn_scale = (bn_gamma / jnp.sqrt(bn_var + bn_eps)).astype(f32)
    bn_shift = (bn_beta - bn_mean * bn_scale).astype(f32)
    # 1-D SMEM scalar vector: [avg taps (K) | max taps (K) | conv_b, bn_scale, bn_shift]
    sg_scalars = jnp.concatenate([
        conv_w[0, 0, :].astype(f32), conv_w[0, 1, :].astype(f32),
        conv_b.reshape(1).astype(f32), bn_scale.reshape(1), bn_shift.reshape(1)])

    # Explicit VMEM budget: double-buffered in/out blocks + a few f32 intermediates,
    # clamped to stay under v7x's 64 MiB physical VMEM.
    block_bytes = batch_tile * C * L * x.dtype.itemsize
    f32_slab = batch_tile * C * L * 4
    vmem_limit = int(min(max(4 * block_bytes + 4 * f32_slab + (2 << 20), 32 << 20),
                         48 << 20))

    grid = (B // batch_tile,)
    return pl.pallas_call(
        _cbam1d_kernel,
        out_shape=jax.ShapeDtypeStruct((B, C, L), x.dtype),
        grid_spec=pltpu.PrefetchScalarGridSpec(
            num_scalar_prefetch=0,
            grid=grid,
            in_specs=[
                pl.BlockSpec((batch_tile, C, L), lambda i: (i, 0, 0)),   # x block
                pl.BlockSpec((C, H), lambda i: (0, 0)),                  # W1.T (resident)
                pl.BlockSpec((1, H), lambda i: (0, 0)),                  # b1 row
                pl.BlockSpec((H, C), lambda i: (0, 0)),                  # W2.T (resident)
                pl.BlockSpec((1, C), lambda i: (0, 0)),                  # b2 row
                pl.BlockSpec(memory_space=pltpu.MemorySpace.SMEM),       # 1-D scalars
            ],
            out_specs=pl.BlockSpec((batch_tile, C, L), lambda i: (i, 0, 0)),
        ),
        compiler_params=pltpu.CompilerParams(
            dimension_semantics=("parallel",),
            vmem_limit_bytes=vmem_limit),
        interpret=interpret,
    )(x, w1t, b1r, w2t, b2r, sg_scalars)


def cbam1d_reference(x, w1, b1, w2, b2, conv_w, conv_b,
                     bn_gamma, bn_beta, bn_mean, bn_var, bn_eps=1e-5):
    """Pure-JAX reference mirroring the PyTorch forward (BatchNorm in eval mode)."""
    # ChannelGate1d
    s_avg = jnp.mean(x, axis=-1)
    s_max = jnp.max(x, axis=-1)

    def excite(s):
        h = jnp.maximum(s @ w1.T + b1, 0.0)
        return h @ w2.T + b2

    ch_gate = jax.nn.sigmoid(excite(s_avg) + excite(s_max))[:, :, None]
    xg = x * ch_gate

    # SpatialGate1d
    z = jnp.concatenate([jnp.mean(xg, axis=1, keepdims=True),
                         jnp.max(xg, axis=1, keepdims=True)], axis=1)      # (B, 2, L)
    pad = (conv_w.shape[-1] - 1) // 2
    y = jax.lax.conv_general_dilated(
        z, conv_w, window_strides=(1,), padding=((pad, pad),),
        dimension_numbers=("NCH", "OIH", "NCH")) + conv_b[None, :, None]
    y = jnp.maximum(y, 0.0)
    y = (y - bn_mean) / jnp.sqrt(bn_var + bn_eps) * bn_gamma + bn_beta
    y = jax.nn.sigmoid(y)
    return xg * y


if __name__ == "__main__":
    # Small shapes consistent with the module (in_channels=32, reduction_ratio=16,
    # kernel_size=7); L is a multiple of 128 to keep the output lane-dense.
    B, C, L = 4, 32, 256
    R, K = 16, 7
    H = C // R

    key = jax.random.PRNGKey(0)
    kx, k1, k2, k3, k4, k5, k6, k7, k8, k9 = jax.random.split(key, 10)

    x = jax.random.normal(kx, (B, C, L), dtype=jnp.float32)

    # Parameters in native PyTorch layouts.
    w1 = jax.random.normal(k1, (H, C), jnp.float32) * 0.2     # Linear(C->H).weight
    b1 = jax.random.normal(k2, (H,), jnp.float32) * 0.1
    w2 = jax.random.normal(k3, (C, H), jnp.float32) * 0.2     # Linear(H->C).weight
    b2 = jax.random.normal(k4, (C,), jnp.float32) * 0.1
    conv_w = jax.random.normal(k5, (1, 2, K), jnp.float32) * 0.3   # Conv1d(2,1,7).weight
    conv_b = jax.random.normal(k6, (1,), jnp.float32) * 0.1
    bn_gamma = 1.0 + 0.1 * jax.random.normal(k7, (1,), jnp.float32)
    bn_beta = 0.1 * jax.random.normal(k8, (1,), jnp.float32)
    bn_mean = 0.1 * jax.random.normal(k9, (1,), jnp.float32)
    bn_var = jnp.full((1,), 0.9, jnp.float32)
    bn_eps = 1e-5

    out = cbam1d_forward(x, w1, b1, w2, b2, conv_w, conv_b,
                         bn_gamma, bn_beta, bn_mean, bn_var, bn_eps)
    out = jax.block_until_ready(out)

    ref = cbam1d_reference(x, w1, b1, w2, b2, conv_w, conv_b,
                           bn_gamma, bn_beta, bn_mean, bn_var, bn_eps)
    assert out.shape == (B, C, L)
    max_err = float(jnp.max(jnp.abs(out - ref)))
    assert jnp.allclose(out, ref, atol=1e-4, rtol=1e-4), (
        f"mismatch vs reference, max abs err={max_err}")
    print("KERNEL_OK")
</pallas_src>

<mosaic_0001>
module attributes {stable_mosaic.version = 11 : i64} {
  func.func @_cbam1d_kernel(%arg0: i32, %arg1: memref<2x32x256xf32, #tpu.memory_space<vmem>>, %arg2: memref<32x2xf32, #tpu.memory_space<vmem>>, %arg3: memref<1x2xf32, #tpu.memory_space<vmem>>, %arg4: memref<2x32xf32, #tpu.memory_space<vmem>>, %arg5: memref<1x32xf32, #tpu.memory_space<vmem>>, %arg6: memref<17xf32, #tpu.memory_space<smem>>, %arg7: memref<2x32x256xf32, #tpu.memory_space<vmem>>) attributes {dimension_semantics = [#tpu.dimension_semantics<parallel>], iteration_bounds = array<i64: 2>, scalar_prefetch = 0 : i64, scratch_operands = 0 : i64, tpu.core_type = #tpu.core_type<tc>, window_params = [{transform_indices = @transform_0, window_bounds = array<i64: 2, 32, 256>}, {pipeline_mode = #tpu.pipeline_mode<synchronous>, transform_indices = @transform_1, window_bounds = array<i64: 32, 2>}, {pipeline_mode = #tpu.pipeline_mode<synchronous>, transform_indices = @transform_2, window_bounds = array<i64: 1, 2>}, {pipeline_mode = #tpu.pipeline_mode<synchronous>, transform_indices = @transform_3, window_bounds = array<i64: 2, 32>}, {pipeline_mode = #tpu.pipeline_mode<synchronous>, transform_indices = @transform_4, window_bounds = array<i64: 1, 32>}, {transform_indices = @transform_5, window_bounds = array<i64: 17>}, {transform_indices = @transform_6, window_bounds = array<i64: 2, 32, 256>}]} {
    %c0 = arith.constant 0 : index
    %c0_0 = arith.constant 0 : index
    %0 = vector.load %arg2[%c0, %c0_0] : memref<32x2xf32, #tpu.memory_space<vmem>>, vector<32x2xf32>
    %c0_1 = arith.constant 0 : index
    %c0_2 = arith.constant 0 : index
    %1 = vector.load %arg3[%c0_1, %c0_2] : memref<1x2xf32, #tpu.memory_space<vmem>>, vector<1x2xf32>
    %c0_3 = arith.constant 0 : index
    %c0_4 = arith.constant 0 : index
    %2 = vector.load %arg4[%c0_3, %c0_4] : memref<2x32xf32, #tpu.memory_space<vmem>>, vector<2x32xf32>
    %c0_5 = arith.constant 0 : index
    %c0_6 = arith.constant 0 : index
    %3 = vector.load %arg5[%c0_5, %c0_6] : memref<1x32xf32, #tpu.memory_space<vmem>>, vector<1x32xf32>
    %c14 = arith.constant 14 : index
    %4 = memref.load %arg6[%c14] : memref<17xf32, #tpu.memory_space<smem>>
    %c15 = arith.constant 15 : index
    %5 = memref.load %arg6[%c15] : memref<17xf32, #tpu.memory_space<smem>>
    %c16 = arith.constant 16 : index
    %6 = memref.load %arg6[%c16] : memref<17xf32, #tpu.memory_space<smem>>
    %c0_7 = arith.constant 0 : index
    %c0_8 = arith.constant 0 : index
    %c0_9 = arith.constant 0 : index
    %7 = vector.load %arg1[%c0_7, %c0_8, %c0_9] : memref<2x32x256xf32, #tpu.memory_space<vmem>>, vector<2x32x256xf32>
    %cst = arith.constant dense<0.000000e+00> : vector<2x32xf32>
    %8 = vector.multi_reduction <add>, %7, %cst [2] : vector<2x32x256xf32> to vector<2x32xf32>
    %cst_10 = arith.constant 3.906250e-03 : f32
    %9 = vector.broadcast %cst_10 : f32 to vector<2x32xf32>
    %10 = arith.mulf %8, %9 : vector<2x32xf32>
    %cst_11 = arith.constant dense<0xFF800000> : vector<2x32xf32>
    %11 = vector.multi_reduction <maximumf>, %7, %cst_11 [2] : vector<2x32x256xf32> to vector<2x32xf32>
    %12 = tpu.concatenate %10, %11 in 0 : vector<2x32xf32>, vector<2x32xf32> -> vector<4x32xf32>
    %cst_12 = arith.constant dense<0.000000e+00> : vector<4x2xf32>
    %13 = tpu.matmul %12, %0, %cst_12 {dimension_numbers = #tpu.dot_dimension_numbers<[1], [0], [0], [1], [0, 0, 1, 1], [], []>} : vector<4x32xf32>, vector<32x2xf32>, vector<4x2xf32> -> vector<4x2xf32>
    %14 = vector.broadcast %1 : vector<1x2xf32> to vector<4x2xf32>
    %15 = arith.addf %13, %14 : vector<4x2xf32>
    %cst_13 = arith.constant 0.000000e+00 : f32
    %16 = vector.broadcast %cst_13 : f32 to vector<4x2xf32>
    %17 = arith.maximumf %15, %16 : vector<4x2xf32>
    %cst_14 = arith.constant dense<0.000000e+00> : vector<4x32xf32>
    %18 = tpu.matmul %17, %2, %cst_14 {dimension_numbers = #tpu.dot_dimension_numbers<[1], [0], [0], [1], [0, 0, 1, 1], [], []>} : vector<4x2xf32>, vector<2x32xf32>, vector<4x32xf32> -> vector<4x32xf32>
    %19 = vector.broadcast %3 : vector<1x32xf32> to vector<4x32xf32>
    %20 = arith.addf %18, %19 : vector<4x32xf32>
    %21 = vector.extract_strided_slice %20 {offsets = [0, 0], sizes = [2, 32], strides = [1, 1]} : vector<4x32xf32> to vector<2x32xf32>
    %22 = vector.extract_strided_slice %20 {offsets = [2, 0], sizes = [2, 32], strides = [1, 1]} : vector<4x32xf32> to vector<2x32xf32>
    %23 = arith.addf %21, %22 : vector<2x32xf32>
    %24 = arith.negf %23 : vector<2x32xf32>
    %25 = math.exp %24 : vector<2x32xf32>
    %cst_15 = arith.constant 1.000000e+00 : f32
    %26 = vector.broadcast %cst_15 : f32 to vector<2x32xf32>
    %27 = arith.addf %26, %25 : vector<2x32xf32>
    %28 = arith.divf %26, %27 : vector<2x32xf32>
    %29 = vector.shape_cast %28 : vector<2x32xf32> to vector<2x32x1xf32>
    %30 = vector.broadcast %29 : vector<2x32x1xf32> to vector<2x32x256xf32>
    %31 = arith.mulf %7, %30 : vector<2x32x256xf32>
    %cst_16 = arith.constant dense<0.000000e+00> : vector<2x256xf32>
    %32 = vector.multi_reduction <add>, %31, %cst_16 [1] : vector<2x32x256xf32> to vector<2x256xf32>
    %cst_17 = arith.constant 3.125000e-02 : f32
    %33 = vector.broadcast %cst_17 : f32 to vector<2x256xf32>
    %34 = arith.mulf %32, %33 : vector<2x256xf32>
    %cst_18 = arith.constant dense<0xFF800000> : vector<2x256xf32>
    %35 = vector.multi_reduction <maximumf>, %31, %cst_18 [1] : vector<2x32x256xf32> to vector<2x256xf32>
    %36 = tpu.iota {dimensions = array<i32: 1>} : vector<1x256xi32>
    %c3 = arith.constant 3 : index
    %37 = memref.load %arg6[%c3] : memref<17xf32, #tpu.memory_space<smem>>
    %38 = vector.broadcast %37 : f32 to vector<2x256xf32>
    %39 = arith.mulf %38, %34 : vector<2x256xf32>
    %40 = vector.broadcast %4 : f32 to vector<2x256xf32>
    %41 = arith.addf %40, %39 : vector<2x256xf32>
    %c10 = arith.constant 10 : index
    %42 = memref.load %arg6[%c10] : memref<17xf32, #tpu.memory_space<smem>>
    %43 = vector.broadcast %42 : f32 to vector<2x256xf32>
    %44 = arith.mulf %43, %35 : vector<2x256xf32>
    %45 = arith.addf %41, %44 : vector<2x256xf32>
    %c0_19 = arith.constant 0 : index
    %46 = memref.load %arg6[%c0_19] : memref<17xf32, #tpu.memory_space<smem>>
    %c3_i32 = arith.constant 3 : i32
    %47 = tpu.dynamic_rotate %34 by %c3_i32 dim 1 : vector<2x256xf32>, i32 -> vector<2x256xf32>
    %c3_i32_20 = arith.constant 3 : i32
    %48 = vector.broadcast %c3_i32_20 : i32 to vector<1x256xi32>
    %49 = arith.cmpi sge, %36, %48 : vector<1x256xi32>
    %cst_21 = arith.constant 0.000000e+00 : f32
    %50 = vector.shape_cast %49 : vector<1x256xi1> to vector<1x256xi1>
    %51 = vector.broadcast %50 : vector<1x256xi1> to vector<2x256xi1>
    %52 = vector.broadcast %cst_21 : f32 to vector<2x256xf32>
    %53 = arith.select %51, %47, %52 : vector<2x256xi1>, vector<2x256xf32>
    %54 = vector.broadcast %46 : f32 to vector<2x256xf32>
    %55 = arith.mulf %54, %53 : vector<2x256xf32>
    %56 = arith.addf %45, %55 : vector<2x256xf32>
    %c7 = arith.constant 7 : index
    %57 = memref.load %arg6[%c7] : memref<17xf32, #tpu.memory_space<smem>>
    %c3_i32_22 = arith.constant 3 : i32
    %58 = tpu.dynamic_rotate %35 by %c3_i32_22 dim 1 : vector<2x256xf32>, i32 -> vector<2x256xf32>
    %c3_i32_23 = arith.constant 3 : i32
    %59 = vector.broadcast %c3_i32_23 : i32 to vector<1x256xi32>
    %60 = arith.cmpi sge, %36, %59 : vector<1x256xi32>
    %cst_24 = arith.constant 0.000000e+00 : f32
    %61 = vector.shape_cast %60 : vector<1x256xi1> to vector<1x256xi1>
    %62 = vector.broadcast %61 : vector<1x256xi1> to vector<2x256xi1>
    %63 = vector.broadcast %cst_24 : f32 to vector<2x256xf32>
    %64 = arith.select %62, %58, %63 : vector<2x256xi1>, vector<2x256xf32>
    %65 = vector.broadcast %57 : f32 to vector<2x256xf32>
    %66 = arith.mulf %65, %64 : vector<2x256xf32>
    %67 = arith.addf %56, %66 : vector<2x256xf32>
    %c1 = arith.constant 1 : index
    %68 = memref.load %arg6[%c1] : memref<17xf32, #tpu.memory_space<smem>>
    %c2_i32 = arith.constant 2 : i32
    %69 = tpu.dynamic_rotate %34 by %c2_i32 dim 1 : vector<2x256xf32>, i32 -> vector<2x256xf32>
    %c2_i32_25 = arith.constant 2 : i32
    %70 = vector.broadcast %c2_i32_25 : i32 to vector<1x256xi32>
    %71 = arith.cmpi sge, %36, %70 : vector<1x256xi32>
    %cst_26 = arith.constant 0.000000e+00 : f32
    %72 = vector.shape_cast %71 : vector<1x256xi1> to vector<1x256xi1>
    %73 = vector.broadcast %72 : vector<1x256xi1> to vector<2x256xi1>
    %74 = vector.broadcast %cst_26 : f32 to vector<2x256xf32>
    %75 = arith.select %73, %69, %74 : vector<2x256xi1>, vector<2x256xf32>
    %76 = vector.broadcast %68 : f32 to vector<2x256xf32>
    %77 = arith.mulf %76, %75 : vector<2x256xf32>
    %78 = arith.addf %67, %77 : vector<2x256xf32>
    %c8 = arith.constant 8 : index
    %79 = memref.load %arg6[%c8] : memref<17xf32, #tpu.memory_space<smem>>
    %c2_i32_27 = arith.constant 2 : i32
    %80 = tpu.dynamic_rotate %35 by %c2_i32_27 dim 1 : vector<2x256xf32>, i32 -> vector<2x256xf32>
    %c2_i32_28 = arith.constant 2 : i32
    %81 = vector.broadcast %c2_i32_28 : i32 to vector<1x256xi32>
    %82 = arith.cmpi sge, %36, %81 : vector<1x256xi32>
    %cst_29 = arith.constant 0.000000e+00 : f32
    %83 = vector.shape_cast %82 : vector<1x256xi1> to vector<1x256xi1>
    %84 = vector.broadcast %83 : vector<1x256xi1> to vector<2x256xi1>
    %85 = vector.broadcast %cst_29 : f32 to vector<2x256xf32>
    %86 = arith.select %84, %80, %85 : vector<2x256xi1>, vector<2x256xf32>
    %87 = vector.broadcast %79 : f32 to vector<2x256xf32>
    %88 = arith.mulf %87, %86 : vector<2x256xf32>
    %89 = arith.addf %78, %88 : vector<2x256xf32>
    %c2 = arith.constant 2 : index
    %90 = memref.load %arg6[%c2] : memref<17xf32, #tpu.memory_space<smem>>
    %c1_i32 = arith.constant 1 : i32
    %91 = tpu.dynamic_rotate %34 by %c1_i32 dim 1 : vector<2x256xf32>, i32 -> vector<2x256xf32>
    %c1_i32_30 = arith.constant 1 : i32
    %92 = vector.broadcast %c1_i32_30 : i32 to vector<1x256xi32>
    %93 = arith.cmpi sge, %36, %92 : vector<1x256xi32>
    %cst_31 = arith.constant 0.000000e+00 : f32
    %94 = vector.shape_cast %93 : vector<1x256xi1> to vector<1x256xi1>
    %95 = vector.broadcast %94 : vector<1x256xi1> to vector<2x256xi1>
    %96 = vector.broadcast %cst_31 : f32 to vector<2x256xf32>
    %97 = arith.select %95, %91, %96 : vector<2x256xi1>, vector<2x256xf32>
    %98 = vector.broadcast %90 : f32 to vector<2x256xf32>
    %99 = arith.mulf %98, %97 : vector<2x256xf32>
    %100 = arith.addf %89, %99 : vector<2x256xf32>
    %c9 = arith.constant 9 : index
    %101 = memref.load %arg6[%c9] : memref<17xf32, #tpu.memory_space<smem>>
    %c1_i32_32 = arith.constant 1 : i32
    %102 = tpu.dynamic_rotate %35 by %c1_i32_32 dim 1 : vector<2x256xf32>, i32 -> vector<2x256xf32>
    %c1_i32_33 = arith.constant 1 : i32
    %103 = vector.broadcast %c1_i32_33 : i32 to vector<1x256xi32>
    %104 = arith.cmpi sge, %36, %103 : vector<1x256xi32>
    %cst_34 = arith.constant 0.000000e+00 : f32
    %105 = vector.shape_cast %104 : vector<1x256xi1> to vector<1x256xi1>
    %106 = vector.broadcast %105 : vector<1x256xi1> to vector<2x256xi1>
    %107 = vector.broadcast %cst_34 : f32 to vector<2x256xf32>
    %108 = arith.select %106, %102, %107 : vector<2x256xi1>, vector<2x256xf32>
    %109 = vector.broadcast %101 : f32 to vector<2x256xf32>
    %110 = arith.mulf %109, %108 : vector<2x256xf32>
    %111 = arith.addf %100, %110 : vector<2x256xf32>
    %c4 = arith.constant 4 : index
    %112 = memref.load %arg6[%c4] : memref<17xf32, #tpu.memory_space<smem>>
    %c255_i32 = arith.constant 255 : i32
    %113 = tpu.dynamic_rotate %34 by %c255_i32 dim 1 : vector<2x256xf32>, i32 -> vector<2x256xf32>
    %c255_i32_35 = arith.constant 255 : i32
    %114 = vector.broadcast %c255_i32_35 : i32 to vector<1x256xi32>
    %115 = arith.cmpi slt, %36, %114 : vector<1x256xi32>
    %cst_36 = arith.constant 0.000000e+00 : f32
    %116 = vector.shape_cast %115 : vector<1x256xi1> to vector<1x256xi1>
    %117 = vector.broadcast %116 : vector<1x256xi1> to vector<2x256xi1>
    %118 = vector.broadcast %cst_36 : f32 to vector<2x256xf32>
    %119 = arith.select %117, %113, %118 : vector<2x256xi1>, vector<2x256xf32>
    %120 = vector.broadcast %112 : f32 to vector<2x256xf32>
    %121 = arith.mulf %120, %119 : vector<2x256xf32>
    %122 = arith.addf %111, %121 : vector<2x256xf32>
    %c11 = arith.constant 11 : index
    %123 = memref.load %arg6[%c11] : memref<17xf32, #tpu.memory_space<smem>>
    %c255_i32_37 = arith.constant 255 : i32
    %124 = tpu.dynamic_rotate %35 by %c255_i32_37 dim 1 : vector<2x256xf32>, i32 -> vector<2x256xf32>
    %c255_i32_38 = arith.constant 255 : i32
    %125 = vector.broadcast %c255_i32_38 : i32 to vector<1x256xi32>
    %126 = arith.cmpi slt, %36, %125 : vector<1x256xi32>
    %cst_39 = arith.constant 0.000000e+00 : f32
    %127 = vector.shape_cast %126 : vector<1x256xi1> to vector<1x256xi1>
    %128 = vector.broadcast %127 : vector<1x256xi1> to vector<2x256xi1>
    %129 = vector.broadcast %cst_39 : f32 to vector<2x256xf32>
    %130 = arith.select %128, %124, %129 : vector<2x256xi1>, vector<2x256xf32>
    %131 = vector.broadcast %123 : f32 to vector<2x256xf32>
    %132 = arith.mulf %131, %130 : vector<2x256xf32>
    %133 = arith.addf %122, %132 : vector<2x256xf32>
    %c5 = arith.constant 5 : index
    %134 = memref.load %arg6[%c5] : memref<17xf32, #tpu.memory_space<smem>>
    %c254_i32 = arith.constant 254 : i32
    %135 = tpu.dynamic_rotate %34 by %c254_i32 dim 1 : vector<2x256xf32>, i32 -> vector<2x256xf32>
    %c254_i32_40 = arith.constant 254 : i32
    %136 = vector.broadcast %c254_i32_40 : i32 to vector<1x256xi32>
    %137 = arith.cmpi slt, %36, %136 : vector<1x256xi32>
    %cst_41 = arith.constant 0.000000e+00 : f32
    %138 = vector.shape_cast %137 : vector<1x256xi1> to vector<1x256xi1>
    %139 = vector.broadcast %138 : vector<1x256xi1> to vector<2x256xi1>
    %140 = vector.broadcast %cst_41 : f32 to vector<2x256xf32>
    %141 = arith.select %139, %135, %140 : vector<2x256xi1>, vector<2x256xf32>
    %142 = vector.broadcast %134 : f32 to vector<2x256xf32>
    %143 = arith.mulf %142, %141 : vector<2x256xf32>
    %144 = arith.addf %133, %143 : vector<2x256xf32>
    %c12 = arith.constant 12 : index
    %145 = memref.load %arg6[%c12] : memref<17xf32, #tpu.memory_space<smem>>
    %c254_i32_42 = arith.constant 254 : i32
    %146 = tpu.dynamic_rotate %35 by %c254_i32_42 dim 1 : vector<2x256xf32>, i32 -> vector<2x256xf32>
    %c254_i32_43 = arith.constant 254 : i32
    %147 = vector.broadcast %c254_i32_43 : i32 to vector<1x256xi32>
    %148 = arith.cmpi slt, %36, %147 : vector<1x256xi32>
    %cst_44 = arith.constant 0.000000e+00 : f32
    %149 = vector.shape_cast %148 : vector<1x256xi1> to vector<1x256xi1>
    %150 = vector.broadcast %149 : vector<1x256xi1> to vector<2x256xi1>
    %151 = vector.broadcast %cst_44 : f32 to vector<2x256xf32>
    %152 = arith.select %150, %146, %151 : vector<2x256xi1>, vector<2x256xf32>
    %153 = vector.broadcast %145 : f32 to vector<2x256xf32>
    %154 = arith.mulf %153, %152 : vector<2x256xf32>
    %155 = arith.addf %144, %154 : vector<2x256xf32>
    %c6 = arith.constant 6 : index
    %156 = memref.load %arg6[%c6] : memref<17xf32, #tpu.memory_space<smem>>
    %c253_i32 = arith.constant 253 : i32
    %157 = tpu.dynamic_rotate %34 by %c253_i32 dim 1 : vector<2x256xf32>, i32 -> vector<2x256xf32>
    %c253_i32_45 = arith.constant 253 : i32
    %158 = vector.broadcast %c253_i32_45 : i32 to vector<1x256xi32>
    %159 = arith.cmpi slt, %36, %158 : vector<1x256xi32>
    %cst_46 = arith.constant 0.000000e+00 : f32
    %160 = vector.shape_cast %159 : vector<1x256xi1> to vector<1x256xi1>
    %161 = vector.broadcast %160 : vector<1x256xi1> to vector<2x256xi1>
    %162 = vector.broadcast %cst_46 : f32 to vector<2x256xf32>
    %163 = arith.select %161, %157, %162 : vector<2x256xi1>, vector<2x256xf32>
    %164 = vector.broadcast %156 : f32 to vector<2x256xf32>
    %165 = arith.mulf %164, %163 : vector<2x256xf32>
    %166 = arith.addf %155, %165 : vector<2x256xf32>
    %c13 = arith.constant 13 : index
    %167 = memref.load %arg6[%c13] : memref<17xf32, #tpu.memory_space<smem>>
    %c253_i32_47 = arith.constant 253 : i32
    %168 = tpu.dynamic_rotate %35 by %c253_i32_47 dim 1 : vector<2x256xf32>, i32 -> vector<2x256xf32>
    %c253_i32_48 = arith.constant 253 : i32
    %169 = vector.broadcast %c253_i32_48 : i32 to vector<1x256xi32>
    %170 = arith.cmpi slt, %36, %169 : vector<1x256xi32>
    %cst_49 = arith.constant 0.000000e+00 : f32
    %171 = vector.shape_cast %170 : vector<1x256xi1> to vector<1x256xi1>
    %172 = vector.broadcast %171 : vector<1x256xi1> to vector<2x256xi1>
    %173 = vector.broadcast %cst_49 : f32 to vector<2x256xf32>
    %174 = arith.select %172, %168, %173 : vector<2x256xi1>, vector<2x256xf32>
    %175 = vector.broadcast %167 : f32 to vector<2x256xf32>
    %176 = arith.mulf %175, %174 : vector<2x256xf32>
    %177 = arith.addf %166, %176 : vector<2x256xf32>
    %cst_50 = arith.constant 0.000000e+00 : f32
    %178 = vector.broadcast %cst_50 : f32 to vector<2x256xf32>
    %179 = arith.maximumf %177, %178 : vector<2x256xf32>
    %180 = vector.broadcast %5 : f32 to vector<2x256xf32>
    %181 = arith.mulf %179, %180 : vector<2x256xf32>
    %182 = vector.broadcast %6 : f32 to vector<2x256xf32>
    %183 = arith.addf %181, %182 : vector<2x256xf32>
    %184 = arith.negf %183 : vector<2x256xf32>
    %185 = math.exp %184 : vector<2x256xf32>
    %cst_51 = arith.constant 1.000000e+00 : f32
    %186 = vector.broadcast %cst_51 : f32 to vector<2x256xf32>
    %187 = arith.addf %186, %185 : vector<2x256xf32>
    %188 = arith.divf %186, %187 : vector<2x256xf32>
    %189 = vector.shape_cast %188 : vector<2x256xf32> to vector<2x1x256xf32>
    %190 = vector.broadcast %189 : vector<2x1x256xf32> to vector<2x32x256xf32>
    %191 = arith.mulf %31, %190 : vector<2x32x256xf32>
    %c0_52 = arith.constant 0 : index
    %c0_53 = arith.constant 0 : index
    %c0_54 = arith.constant 0 : index
    %192 = vector.load %arg7[%c0_52, %c0_53, %c0_54] : memref<2x32x256xf32, #tpu.memory_space<vmem>>, vector<2x32x256xf32>
    tpu.vector_store %arg7[%c0_52, %c0_53, %c0_54], %191 {strides = array<i32>} : memref<2x32x256xf32, #tpu.memory_space<vmem>>, vector<2x32x256xf32>,
    return
  }
  func.func @transform_0(%arg0: i32) -> (i32, i32, i32) {
    %c0_i32 = arith.constant 0 : i32
    %c0_i32_0 = arith.constant 0 : i32
    %c0_i32_1 = arith.constant 0 : i32
    return %arg0, %c0_i32, %c0_i32_0 : i32, i32, i32
  }
  func.func @transform_1(%arg0: i32) -> (i32, i32) {
    %c0_i32 = arith.constant 0 : i32
    %c0_i32_0 = arith.constant 0 : i32
    %c0_i32_1 = arith.constant 0 : i32
    return %c0_i32, %c0_i32_0 : i32, i32
  }
  func.func @transform_2(%arg0: i32) -> (i32, i32) {
    %c0_i32 = arith.constant 0 : i32
    %c0_i32_0 = arith.constant 0 : i32
    %c0_i32_1 = arith.constant 0 : i32
    return %c0_i32, %c0_i32_0 : i32, i32
  }
  func.func @transform_3(%arg0: i32) -> (i32, i32) {
    %c0_i32 = arith.constant 0 : i32
    %c0_i32_0 = arith.constant 0 : i32
    %c0_i32_1 = arith.constant 0 : i32
    return %c0_i32, %c0_i32_0 : i32, i32
  }
  func.func @transform_4(%arg0: i32) -> (i32, i32) {
    %c0_i32 = arith.constant 0 : i32
    %c0_i32_0 = arith.constant 0 : i32
    %c0_i32_1 = arith.constant 0 : i32
    return %c0_i32, %c0_i32_0 : i32, i32
  }
  func.func @transform_5(%arg0: i32) -> i32 {
    %c0_i32 = arith.constant 0 : i32
    %c0_i32_0 = arith.constant 0 : i32
    return %c0_i32 : i32
  }
  func.func @transform_6(%arg0: i32) -> (i32, i32, i32) {
    %c0_i32 = arith.constant 0 : i32
    %c0_i32_0 = arith.constant 0 : i32
    %c0_i32_1 = arith.constant 0 : i32
    return %arg0, %c0_i32, %c0_i32_0 : i32, i32, i32
  }
}

</mosaic_0001>

<llo_original>
// kernel: tpu_custom_call.1
$region0: #{tpu_custom_call.1}
  #allocation0 [shape = 'u32[]', space=smem, size = 0x4, offset = 0x4, fixed_abs, tag = 'smem constant byte address 0x4 - core index']
  #allocation1 [shape = 'u32[144,128]{1,0:T(1,128)}', space=vmem, size = 0x12000, scoped, tag = 'internal scratch']
  %s0 = inlined_call_operand.hbm [shape: f32[4,32,256], index: 0, kind: input, shape index: {}]
  %s1 = inlined_call_operand.vmem [shape: f32[32,2], index: 1, kind: input, shape index: {}]
  %s2 = inlined_call_operand.vmem [shape: f32[1,2], index: 2, kind: input, shape index: {}]
  %s3 = inlined_call_operand.vmem [shape: f32[2,32], index: 3, kind: input, shape index: {}]
  %s4 = inlined_call_operand.vmem [shape: f32[1,32], index: 4, kind: input, shape index: {}]
  %s5 = inlined_call_operand.vmem [shape: f32[17], index: 5, kind: input, shape index: {}]
  %s6 = inlined_call_operand.hbm [shape: f32[4,32,256], index: 6, kind: output, shape index: {}]
  %s7 = sld [smem:[#allocation0]]
  $region65: #{tpu_custom_call.1} parent=0
    _
  %s9 = ssub.s32 1, %s7
  %s10 = scalar_select 0, %s9, %s7
  $region1: #{tpu_custom_call.1} parent=0
    #allocation2 [shape = 'u8[131072]{0}', space=vmem, size = 0x20000, scoped, tag = 'input window, operand 0']
    #allocation3 [shape = 's32[2]{0}', space=sflag, size = 0x8, scoped, tag = 'scoped memory for tpu_custom_call.1']
    #allocation4 [shape = 's32[2]{0}', space=sflag, size = 0x8, scoped, tag = 'scoped memory for tpu_custom_call.1']
    #allocation5 [shape = 's32[2]{0}', space=sflag, size = 0x8, scoped, tag = 'scoped memory for tpu_custom_call.1']
    #allocation6 [shape = 'u8[512]{0}', space=smem, size = 0x200, scoped, tag = 'input window, operand 5, single buffered']
    #allocation7 [shape = 'u8[131072]{0}', space=vmem, size = 0x20000, scoped, tag = 'output window, operand 0']
    %11 = vsyncpa [#allocation3], 0
    %s12 = scalar_lea.sflag [#allocation3], 1
    %13 = vsyncpa %s12, 0
    %14 = vsyncpa [#allocation5], 0
    %15 = vsyncpa [#allocation4], 0
    %s16 = scalar_lea.sflag [#allocation4], 1
    %17 = vsyncpa %s16, 0
    loop: start=0, step=1, limit=4
    $region2: #{tpu_custom_call.1} parent=1 // loop_pre_header
      _
    $region3: #{tpu_custom_call.1} parent=1 // loop_header
      %s19 = sphi 0, %s23
      %p20 = scmp.ge.s32.totalorder %s19, 4
      %s29 = sphi 0, %s31
      %s32 = sphi 0, %s29
      %s33 = sphi 0, %s32
      %s49 = sphi 0, %s33
      %s53 = sphi 0, %s53
      %s55 = sphi 0, %s53
      %s56 = sphi 0, %s55
      %s70 = sphi 0, %s56
      %s74 = sphi 0, %s74
      %s76 = sphi 0, %s74
      %s77 = sphi 0, %s76
      %s91 = sphi 0, %s77
      %s95 = sphi 0, %s95
      %s97 = sphi 0, %s95
      %s98 = sphi 0, %s97
      %s112 = sphi 0, %s98
      %s116 = sphi 0, %s116
      %s118 = sphi 0, %s116
      %s119 = sphi 0, %s118
      %s133 = sphi 0, %s119
      %s137 = sphi 0, %s137
      %s139 = sphi 0, %s137
      %s140 = sphi 0, %s139
      %s154 = sphi 0, %s140
      %s160 = sphi 0, %s162
      %s163 = sphi 0, %s160
      %s164 = sphi 0, %s163
      %s180 = sphi 0, %s164
    $region4: #{tpu_custom_call.1} parent=1 // loop_header_branch
      %22 = sbr.rel (%p20) target = $region8
    $region5: #{tpu_custom_call.1} parent=1 // loop_body
      %s24 = ssub.s32 %s19, 1
      %s25 = ssub.s32 %s19, 2
      %s26 = sadd.s32 %s19, 1
      %s27 = ssub.s32 %s19, %s26
      %p28 = scmp.eq.s32.totalorder %s27, 0
      %s30 = sadd.s32 %s29, 1
      %s31 = scalar_select %p28, %s29, %s30
      %p34 = pneg %p28
      %p35 = scmp.eq.s32.totalorder %s19, 1
      %p36 = por %p34, %p35
      %p37 = scmp.ne.s32.totalorder %s29, %s32
      %p38 = scmp.eq.s32.totalorder %s19, 0
      %p39 = por %p37, %p38
      %p40 = scmp.ne.s32.totalorder %s29, %s32
      %p41 = scmp.eq.s32.totalorder %s24, 1
      %p42 = por %p40, %p41
      %p43 = scmp.ne.s32.totalorder %s32, %s33
      %p44 = scmp.eq.s32.totalorder %s24, 0
      %p45 = por %p43, %p44
      %p46 = scmp.ne.s32.totalorder %s32, %s33
      %p47 = scmp.eq.s32.totalorder %s25, 1
      %p48 = por %p46, %p47
      %p50 = scmp.ne.s32.totalorder %s33, %s49
      %p51 = scmp.eq.s32.totalorder %s25, 0
      %p52 = por %p50, %p51
      %s54 = sadd.s32 %s53, 1
      %p57 = scmp.eq.s32.totalorder %s19, 1
      %p58 = scmp.ne.s32.totalorder %s53, %s55
      %p59 = scmp.eq.s32.totalorder %s19, 0
      %p60 = por %p58, %p59
      %p61 = scmp.ne.s32.totalorder %s53, %s55
      %p62 = scmp.eq.s32.totalorder %s24, 1
      %p63 = por %p61, %p62
      %p64 = scmp.ne.s32.totalorder %s55, %s56
      %p65 = scmp.eq.s32.totalorder %s24, 0
      %p66 = por %p64, %p65
      %p67 = scmp.ne.s32.totalorder %s55, %s56
      %p68 = scmp.eq.s32.totalorder %s25, 1
      %p69 = por %p67, %p68
      %p71 = scmp.ne.s32.totalorder %s56, %s70
      %p72 = scmp.eq.s32.totalorder %s25, 0
      %p73 = por %p71, %p72
      %s75 = sadd.s32 %s74, 1
      %p78 = scmp.eq.s32.totalorder %s19, 1
      %p79 = scmp.ne.s32.totalorder %s74, %s76
      %p80 = scmp.eq.s32.totalorder %s19, 0
      %p81 = por %p79, %p80
      %p82 = scmp.ne.s32.totalorder %s74, %s76
      %p83 = scmp.eq.s32.totalorder %s24, 1
      %p84 = por %p82, %p83
      %p85 = scmp.ne.s32.totalorder %s76, %s77
      %p86 = scmp.eq.s32.totalorder %s24, 0
      %p87 = por %p85, %p86
      %p88 = scmp.ne.s32.totalorder %s76, %s77
      %p89 = scmp.eq.s32.totalorder %s25, 1
      %p90 = por %p88, %p89
      %p92 = scmp.ne.s32.totalorder %s77, %s91
      %p93 = scmp.eq.s32.totalorder %s25, 0
      %p94 = por %p92, %p93
      %s96 = sadd.s32 %s95, 1
      %p99 = scmp.eq.s32.totalorder %s19, 1
      %p100 = scmp.ne.s32.totalorder %s95, %s97
      %p101 = scmp.eq.s32.totalorder %s19, 0
      %p102 = por %p100, %p101
      %p103 = scmp.ne.s32.totalorder %s95, %s97
      %p104 = scmp.eq.s32.totalorder %s24, 1
      %p105 = por %p103, %p104
      %p106 = scmp.ne.s32.totalorder %s97, %s98
      %p107 = scmp.eq.s32.totalorder %s24, 0
      %p108 = por %p106, %p107
      %p109 = scmp.ne.s32.totalorder %s97, %s98
      %p110 = scmp.eq.s32.totalorder %s25, 1
      %p111 = por %p109, %p110
      %p113 = scmp.ne.s32.totalorder %s98, %s112
      %p114 = scmp.eq.s32.totalorder %s25, 0
      %p115 = por %p113, %p114
      %s117 = sadd.s32 %s116, 1
      %p120 = scmp.eq.s32.totalorder %s19, 1
      %p121 = scmp.ne.s32.totalorder %s116, %s118
      %p122 = scmp.eq.s32.totalorder %s19, 0
      %p123 = por %p121, %p122
      %p124 = scmp.ne.s32.totalorder %s116, %s118
      %p125 = scmp.eq.s32.totalorder %s24, 1
      %p126 = por %p124, %p125
      %p127 = scmp.ne.s32.totalorder %s118, %s119
      %p128 = scmp.eq.s32.totalorder %s24, 0
      %p129 = por %p127, %p128
      %p130 = scmp.ne.s32.totalorder %s118, %s119
      %p131 = scmp.eq.s32.totalorder %s25, 1
      %p132 = por %p130, %p131
      %p134 = scmp.ne.s32.totalorder %s119, %s133
      %p135 = scmp.eq.s32.totalorder %s25, 0
      %p136 = por %p134, %p135
      %s138 = sadd.s32 %s137, 1
      %p141 = scmp.eq.s32.totalorder %s19, 1
      %p142 = scmp.ne.s32.totalorder %s137, %s139
      %p143 = scmp.eq.s32.totalorder %s19, 0
      %p144 = por %p142, %p143
      %p145 = scmp.ne.s32.totalorder %s137, %s139
      %p146 = scmp.eq.s32.totalorder %s24, 1
      %p147 = por %p145, %p146
      %p148 = scmp.ne.s32.totalorder %s139, %s140
      %p149 = scmp.eq.s32.totalorder %s24, 0
      %p150 = por %p148, %p149
      %p151 = scmp.ne.s32.totalorder %s139, %s140
      %p152 = scmp.eq.s32.totalorder %s25, 1
      %p153 = por %p151, %p152
      %p155 = scmp.ne.s32.totalorder %s140, %s154
      %p156 = scmp.eq.s32.totalorder %s25, 0
      %p157 = por %p155, %p156
      %s158 = ssub.s32 %s19, %s26
      %p159 = scmp.eq.s32.totalorder %s158, 0
      %s161 = sadd.s32 %s160, 1
      %s162 = scalar_select %p159, %s160, %s161
      %p165 = pneg %p159
      %p166 = scmp.eq.s32.totalorder %s19, 1
      %p167 = por %p165, %p166
      %p168 = scmp.ne.s32.totalorder %s160, %s163
      %p169 = scmp.eq.s32.totalorder %s19, 0
      %p170 = por %p168, %p169
      %p171 = scmp.ne.s32.totalorder %s160, %s163
      %p172 = scmp.eq.s32.totalorder %s24, 1
      %p173 = por %p171, %p172
      %p174 = scmp.ne.s32.totalorder %s163, %s164
      %p175 = scmp.eq.s32.totalorder %s24, 0
      %p176 = por %p174, %p175
      %p177 = scmp.ne.s32.totalorder %s163, %s164
      %p178 = scmp.eq.s32.totalorder %s25, 1
      %p179 = por %p177, %p178
      %p181 = scmp.ne.s32.totalorder %s164, %s180
      %p182 = scmp.eq.s32.totalorder %s25, 0
      %p183 = por %p181, %p182
      %p184 = scmp.le.s32.totalorder 1, %s19
      %p185 = scmp.lt.s32.totalorder %s19, 3
      %p186 = pnand %p184, %p185
      %p187 = pneg %p186
      // Predicated region
      $region9: #{tpu_custom_call.1} parent=5 // pred_check
        _
      $region10: #{tpu_custom_call.1} parent=5 // pred_check_branch
        %189 = sbr.rel (%p186) target = $region12
      $region11: #{tpu_custom_call.1} parent=5 // pred_region
        %s190 = ssub.s32 %s19, 1
        // Predicated region
        $region13: #{tpu_custom_call.1} parent=11 // pred_check
          %p191 = pneg %p66
        $region14: #{tpu_custom_call.1} parent=11 // pred_check_branch
          %193 = sbr.rel (%p191) target = $region16
        $region15: #{tpu_custom_call.1} parent=11 // pred_region
          _
        $region16: #{tpu_custom_call.1} parent=11 // pred_fallthru
          _
        // Predicated region
        $region17: #{tpu_custom_call.1} parent=11 // pred_check
          %p194 = pneg %p87
        $region18: #{tpu_custom_call.1} parent=11 // pred_check_branch
          %196 = sbr.rel (%p194) target = $region20
        $region19: #{tpu_custom_call.1} parent=11 // pred_region
          _
        $region20: #{tpu_custom_call.1} parent=11 // pred_fallthru
          _
        // Predicated region
        $region21: #{tpu_custom_call.1} parent=11 // pred_check
          %p197 = pneg %p108
        $region22: #{tpu_custom_call.1} parent=11 // pred_check_branch
          %199 = sbr.rel (%p197) target = $region24
        $region23: #{tpu_custom_call.1} parent=11 // pred_region
          _
        $region24: #{tpu_custom_call.1} parent=11 // pred_fallthru
          _
        // Predicated region
        $region25: #{tpu_custom_call.1} parent=11 // pred_check
          %p200 = pneg %p129
        $region26: #{tpu_custom_call.1} parent=11 // pred_check_branch
          %202 = sbr.rel (%p200) target = $region28
        $region27: #{tpu_custom_call.1} parent=11 // pred_region
          _
        $region28: #{tpu_custom_call.1} parent=11 // pred_fallthru
          _
        // Predicated region
        $region29: #{tpu_custom_call.1} parent=11 // pred_check
          %p203 = pneg %p150
        $region30: #{tpu_custom_call.1} parent=11 // pred_check_branch
          %205 = sbr.rel (%p203) target = $region32
        $region31: #{tpu_custom_call.1} parent=11 // pred_region
          %s207 = ssub.s32 16, 16
          %208 = vsyncadd [#allocation5], %s207
          %s210 = sshll.u32 %s5, 4
          %s211 = int_to_ptr.vmem [resolvable:$true] %s210
          %213 = dma.vmem_to_smem %s211, 16, [#allocation6], [#allocation5]
        $region32: #{tpu_custom_call.1} parent=11 // pred_fallthru
          _
      $region12: #{tpu_custom_call.1} parent=5 // pred_fallthru
        _
      %p214 = scmp.lt.s32.totalorder %s19, 2
      // Predicated region
      $region33: #{tpu_custom_call.1} parent=5 // pred_check
        %p215 = pneg %p214
      $region34: #{tpu_custom_call.1} parent=5 // pred_check_branch
        %217 = sbr.rel (%p215) target = $region36
      $region35: #{tpu_custom_call.1} parent=5 // pred_region
        // Predicated region
        $region37: #{tpu_custom_call.1} parent=35 // pred_check
          %p218 = pneg %p39
        $region38: #{tpu_custom_call.1} parent=35 // pred_check_branch
          %220 = sbr.rel (%p218) target = $region40
        $region39: #{tpu_custom_call.1} parent=35 // pred_region
          %s221 = sand.u32 %s29, 1
          %s222 = scalar_lea.sflag [#allocation3], %s221
          %s223 = sand.u32 %s29, 1
          %s224 = smul.addr %s223, 128
          %s225 = scalar_lea.vmem [#allocation2], %s224
          %s226 = smul.u32 2, %s19
          %s228 = ssub.s32 2048, 2048
          %229 = vsyncadd %s222, %s228
          %s230 = smul.addr %s226, 8
          %s231 = smul.addr %s230, 128
          %s232 = scalar_lea.hbm %s0, %s231
          %s233 = sshll.u32 %s225, 4
          %s234 = int_to_ptr.vmem [resolvable:$true] %s233
          %239 = dma.hbm_to_vmem [thread:$0]  %s232, 2048, %s234, %s222, 256, 256, 16
        $region40: #{tpu_custom_call.1} parent=35 // pred_fallthru
          _
      $region36: #{tpu_custom_call.1} parent=5 // pred_fallthru
        _
      %p240 = scmp.le.s32.totalorder 1, %s19
      %p241 = scmp.lt.s32.totalorder %s19, 3
      %p242 = pnand %p240, %p241
      %p243 = pneg %p242
      // Predicated region
      $region41: #{tpu_custom_call.1} parent=5 // pred_check
        _
      $region42: #{tpu_custom_call.1} parent=5 // pred_check_branch
        %245 = sbr.rel (%p242) target = $region44
      $region43: #{tpu_custom_call.1} parent=5 // pred_region
        %s246 = ssub.s32 %s19, 1
        %s247 = sand.u32 %s32, 1
        %s248 = scalar_lea.sflag [#allocation3], %s247
        %s249 = sand.u32 %s32, 1
        %s250 = smul.addr %s249, 128
        %s251 = scalar_lea.vmem [#allocation2], %s250
        // Predicated region
        $region45: #{tpu_custom_call.1} parent=43 // pred_check
          %p252 = pneg %p45
        $region46: #{tpu_custom_call.1} parent=43 // pred_check_branch
          %254 = sbr.rel (%p252) target = $region48
        $region47: #{tpu_custom_call.1} parent=43 // pred_region
          %255 = dma.done %s248, 2048
        $region48: #{tpu_custom_call.1} parent=43 // pred_fallthru
          _
        // Predicated region
        $region49: #{tpu_custom_call.1} parent=43 // pred_check
          %p256 = pneg %p150
        $region50: #{tpu_custom_call.1} parent=43 // pred_check_branch
          %258 = sbr.rel (%p256) target = $region52
        $region51: #{tpu_custom_call.1} parent=43 // pred_region
          %259 = dma.done [#allocation5], 16
        $region52: #{tpu_custom_call.1} parent=43 // pred_fallthru
          _
        %260 = sfence
        %s261 = sand.u32 %s32, 1
        %s262 = scalar_lea.sflag [#allocation3], %s261
        %s263 = sand.u32 %s32, 1
        %s264 = smul.addr %s263, 128
        %s265 = scalar_lea.vmem [#allocation2], %s264
        %p266 = pneg %p45
        %p267 = pneg %p42
        %p268 = pneg %p66
        %p269 = pneg %p63
        %p270 = pneg %p87
        %p271 = pneg %p84
        %p272 = pneg %p108
        %p273 = pneg %p105
        %p274 = pneg %p129
        %p275 = pneg %p126
        %p276 = pneg %p150
        %p277 = pneg %p147
        %p278 = pneg %p176
        %p279 = pneg %p173
        %s280 = sand.u32 %s163, 1
        %s281 = scalar_lea.sflag [#allocation4], %s280
        %s282 = sand.u32 %s163, 1
        %s283 = smul.addr %s282, 128
        %s284 = scalar_lea.vmem [#allocation7], %s283
        %s285 = smul.u32 2, %s24
        %s286 = smul.u32 2, %s24
        %v287 = vld [vmem:[%s1] sm:$0xff]
        %v288 = vld [vmem:[%s1 + $0x8] sm:$0xff]
        %v289 = vld [vmem:[%s1 + $0x10] sm:$0xff]
        %v290 = vld [vmem:[%s1 + $0x18] sm:$0xff]
        %v291 = vld [vmem:[%s2] sm:$0x1]
        %v292 = vld [vmem:[%s3] sm:$0x3]
        %v293 = vld [vmem:[%s4] sm:$0x1]
        %s294 = sld [smem:[#allocation6 + $0xe]]
        %s295 = sld [smem:[#allocation6 + $0xf]]
        %s296 = sld [smem:[#allocation6 + $0x10]]
        %v297 = vld [vmem:[%s251] sm:$0xff]
        %v298 = vld [vmem:[%s251 + $0x8] sm:$0xff]
        %v299 = vld [vmem:[%s251 + $0x10] sm:$0xff]
        %v300 = vld [vmem:[%s251 + $0x18] sm:$0xff]
        %v301 = vld [vmem:[%s251 + $0x20] sm:$0xff]
        %v302 = vld [vmem:[%s251 + $0x28] sm:$0xff]
        %v303 = vld [vmem:[%s251 + $0x30] sm:$0xff]
        %v304 = vld [vmem:[%s251 + $0x38] sm:$0xff]
        %v305 = vld [vmem:[%s251 + $0x40] sm:$0xff]
        %v306 = vld [vmem:[%s251 + $0x48] sm:$0xff]
        %v307 = vld [vmem:[%s251 + $0x50] sm:$0xff]
        %v308 = vld [vmem:[%s251 + $0x58] sm:$0xff]
        %v309 = vld [vmem:[%s251 + $0x60] sm:$0xff]
        %v310 = vld [vmem:[%s251 + $0x68] sm:$0xff]
        %v311 = vld [vmem:[%s251 + $0x70] sm:$0xff]
        %v312 = vld [vmem:[%s251 + $0x78] sm:$0xff]
        %v313 = vadd.f32 %v297, %v298
        %314 = vadd.xlane.f32.xlu0 %v313
        %v315 = vpop.xlane.xlu0 %314
        %v316 = vadd.f32 %v299, %v300
        %317 = vadd.xlane.f32.xlu0 %v316
        %v318 = vpop.xlane.xlu0 %317
        %v319 = vadd.f32 %v301, %v302
        %320 = vadd.xlane.f32.xlu0 %v319
        %v321 = vpop.xlane.xlu0 %320
        %v322 = vadd.f32 %v303, %v304
        %323 = vadd.xlane.f32.xlu0 %v322
        %v324 = vpop.xlane.xlu0 %323
        %v325 = vadd.f32 %v305, %v306
        %326 = vadd.xlane.f32.xlu0 %v325
        %v327 = vpop.xlane.xlu0 %326
        %v328 = vadd.f32 %v307, %v308
        %329 = vadd.xlane.f32.xlu0 %v328
        %v330 = vpop.xlane.xlu0 %329
        %v331 = vadd.f32 %v309, %v310
        %332 = vadd.xlane.f32.xlu0 %v331
        %v333 = vpop.xlane.xlu0 %332
        %v334 = vadd.f32 %v311, %v312
        %335 = vadd.xlane.f32.xlu0 %v334
        %v336 = vpop.xlane.xlu0 %335
        %v337 = vmul.f32 %v315, 0.00390625
        %v338 = vmul.f32 %v318, 0.00390625
        %v339 = vmul.f32 %v321, 0.00390625
        %v340 = vmul.f32 %v324, 0.00390625
        %v341 = vmul.f32 %v327, 0.00390625
        %v342 = vmul.f32 %v330, 0.00390625
        %v343 = vmul.f32 %v333, 0.00390625
        %v344 = vmul.f32 %v336, 0.00390625
        %v345 = vmax.f32 %v297, %v298
        %346 = vmax.xlane.f32.xlu0 %v345
        %v347 = vpop.xlane.xlu0 %346
        %v348 = vmax.f32 %v299, %v300
        %349 = vmax.xlane.f32.xlu0 %v348
        %v350 = vpop.xlane.xlu0 %349
        %v351 = vmax.f32 %v301, %v302
        %352 = vmax.xlane.f32.xlu0 %v351
        %v353 = vpop.xlane.xlu0 %352
        %v354 = vmax.f32 %v303, %v304
        %355 = vmax.xlane.f32.xlu0 %v354
        %v356 = vpop.xlane.xlu0 %355
        %v357 = vmax.f32 %v305, %v306
        %358 = vmax.xlane.f32.xlu0 %v357
        %v359 = vpop.xlane.xlu0 %358
        %v360 = vmax.f32 %v307, %v308
        %361 = vmax.xlane.f32.xlu0 %v360
        %v362 = vpop.xlane.xlu0 %361
        %v363 = vmax.f32 %v309, %v310
        %364 = vmax.xlane.f32.xlu0 %v363
        %v365 = vpop.xlane.xlu0 %364
        %v366 = vmax.f32 %v311, %v312
        %367 = vmax.xlane.f32.xlu0 %v366
        %v368 = vpop.xlane.xlu0 %367
        %v377 = vlaneseq
        %v378 = vand.u32 %v377, 127
        %v379 = vlaneseq
        %v380 = vshrl.u32 %v379, 7
        %v381 = vsub.s32 %v378, %v380
        %v382 = vrot.slane %v337, %v381
        %v383 = vadd.s32 %v378, 4294967288
        %v384 = vlaneseq
        %v385 = vshrl.u32 %v384, 7
        %v386 = vsub.s32 %v383, %v385
        %v387 = vrot.slane %v338, %v386
        %vm388 = vcmask 130112
        %v389 = vsel %vm388, %v387, %v382
        %v390 = vadd.s32 %v378, 4294967280
        %v391 = vlaneseq
        %v392 = vshrl.u32 %v391, 7
        %v393 = vsub.s32 %v390, %v392
        %v394 = vrot.slane %v339, %v393
        %vm395 = vcmask 195712
        %v396 = vsel %vm395, %v394, %v389
        %v397 = vadd.s32 %v378, 4294967272
        %v398 = vlaneseq
        %v399 = vshrl.u32 %v398, 7
        %v400 = vsub.s32 %v397, %v399
        %v401 = vrot.slane %v340, %v400
        %vm402 = vcmask 261312
        %v403 = vsel %vm402, %v401, %v396
        %v404 = vlaneseq
        %v405 = vshrl.u32 %v404, 7
        %v406 = vsub.s32 %v378, %v405
        %v407 = vrot.slane %v341, %v406
        %v408 = vlaneseq
        %v409 = vshrl.u32 %v408, 7
        %v410 = vsub.s32 %v383, %v409
        %v411 = vrot.slane %v342, %v410
        %v412 = vsel %vm388, %v411, %v407
        %v413 = vlaneseq
        %v414 = vshrl.u32 %v413, 7
        %v415 = vsub.s32 %v390, %v414
        %v416 = vrot.slane %v343, %v415
        %v417 = vsel %vm395, %v416, %v412
        %v418 = vlaneseq
        %v419 = vshrl.u32 %v418, 7
        %v420 = vsub.s32 %v397, %v419
        %v421 = vrot.slane %v344, %v420
        %v422 = vsel %vm402, %v421, %v417
        %vm423 = vcmask 1041409
        %v424 = vsel %vm423, %v422, %v403
        %v434 = vlaneseq
        %v435 = vshrl.u32 %v434, 7
        %v436 = vsub.s32 %v378, %v435
        %v437 = vrot.slane %v347, %v436
        %v438 = vlaneseq
        %v439 = vshrl.u32 %v438, 7
        %v440 = vsub.s32 %v383, %v439
        %v441 = vrot.slane %v350, %v440
        %v442 = vsel %vm388, %v441, %v437
        %v443 = vlaneseq
        %v444 = vshrl.u32 %v443, 7
        %v445 = vsub.s32 %v390, %v444
        %v446 = vrot.slane %v353, %v445
        %v447 = vsel %vm395, %v446, %v442
        %v448 = vlaneseq
        %v449 = vshrl.u32 %v448, 7
        %v450 = vsub.s32 %v397, %v449
        %v451 = vrot.slane %v356, %v450
        %v452 = vsel %vm402, %v451, %v447
        %v453 = vlaneseq
        %v454 = vshrl.u32 %v453, 7
        %v455 = vsub.s32 %v378, %v454
        %v456 = vrot.slane %v359, %v455
        %v457 = vlaneseq
        %v458 = vshrl.u32 %v457, 7
        %v459 = vsub.s32 %v383, %v458
        %v460 = vrot.slane %v362, %v459
        %v461 = vsel %vm388, %v460, %v456
        %v462 = vlaneseq
        %v463 = vshrl.u32 %v462, 7
        %v464 = vsub.s32 %v390, %v463
        %v465 = vrot.slane %v365, %v464
        %v466 = vsel %vm395, %v465, %v461
        %v467 = vlaneseq
        %v468 = vshrl.u32 %v467, 7
        %v469 = vsub.s32 %v397, %v468
        %v470 = vrot.slane %v368, %v469
        %v471 = vsel %vm402, %v470, %v466
        %vm472 = vcmask 1043459
        %v473 = vsel %vm472, %v471, %v452
        %vm475 = vcmask 1041408
        %v476 = vsel %vm475, %v424, %v473
        %v478 = vlaneseq
        %v479 = vshrl.u32 %v478, 7
        %v480 = vsub.s32 0, %v479
        %v481 = vrot.slane %v291, %v480
        %vm483 = vcmask 261120
        %v485 = vsel %vm483, %v476, 0
        %487 = vmatprep.subr.mxu0 0.0
        %488 = vmatpush1.msra.mxu0 %v287
        %489 = vmatprep.subr.mxu0 0.0
        %490 = vmatpush1.msra.mxu0 %v288
        %491 = vmatprep.subr.mxu0 0.0
        %492 = vmatpush1.msra.mxu0 %v289
        %493 = vmatprep.subr.mxu0 0.0
        %494 = vmatpush1.msra.mxu0 %v290
        %495 = vmatprep.subr.mxu0 0.0
        %496 = vmatpush1.msra.mxu0 0.0
        %497 = vmatprep.subr.mxu0 0.0
        %498 = vmatpush1.msra.mxu0 0.0
        %499 = vmatprep.subr.mxu0 0.0
        %500 = vmatpush1.msra.mxu0 0.0
        %501 = vmatprep.subr.mxu0 0.0
        %502 = vmatpush1.msra.mxu0 0.0
        %503 = vmatprep.subr.mxu0 0.0
        %504 = vmatpush1.msra.mxu0 0.0
        %505 = vmatprep.subr.mxu0 0.0
        %506 = vmatpush1.msra.mxu0 0.0
        %507 = vmatprep.subr.mxu0 0.0
        %508 = vmatpush1.msra.mxu0 0.0
        %509 = vmatprep.subr.mxu0 0.0
        %510 = vmatpush1.msra.mxu0 0.0
        %511 = vmatprep.subr.mxu0 0.0
        %512 = vmatpush1.msra.mxu0 0.0
        %513 = vmatprep.subr.mxu0 0.0
        %514 = vmatpush1.msra.mxu0 0.0
        %515 = vmatprep.subr.mxu0 0.0
        %516 = vmatpush1.msra.mxu0 0.0
        %517 = vmatprep.subr.mxu0 0.0
        %518 = vmatpush1.msra.mxu0 0.0
        %519 = vmatprep.subr.mxu0 0.0
        %520 = vmatpush1.msra.mxu0 0.0
        %521 = vmatprep.subr.mxu0 0.0
        %522 = vmatpush1.msra.mxu0 0.0
        %523 = vmatprep.subr.mxu0 0.0
        %524 = vmatpush1.msra.mxu0 0.0
        %525 = vmatprep.subr.mxu0 0.0
        %526 = vmatpush1.msra.mxu0 0.0
        %527 = vmatprep.subr.mxu0 0.0
        %528 = vmatpush1.msra.mxu0 0.0
        %529 = vmatprep.subr.mxu0 0.0
        %530 = vmatpush1.msra.mxu0 0.0
        %531 = vmatprep.subr.mxu0 0.0
        %532 = vmatpush1.msra.mxu0 0.0
        %533 = vmatprep.subr.mxu0 0.0
        %534 = vmatpush1.msra.mxu0 0.0
        %535 = vmatprep.subr.mxu0 0.0
        %536 = vmatpush1.msra.mxu0 0.0
        %537 = vmatprep.subr.mxu0 0.0
        %538 = vmatpush1.msra.mxu0 0.0
        %539 = vmatprep.subr.mxu0 0.0
        %540 = vmatpush1.msra.mxu0 0.0
        %541 = vmatprep.subr.mxu0 0.0
        %542 = vmatpush1.msra.mxu0 0.0
        %543 = vmatprep.subr.mxu0 0.0
        %544 = vmatpush1.msra.mxu0 0.0
        %545 = vmatprep.subr.mxu0 0.0
        %546 = vmatpush1.msra.mxu0 0.0
        %547 = vmatprep.subr.mxu0 0.0
        %548 = vmatpush1.msra.mxu0 0.0
        %549 = vmatprep.subr.mxu0 0.0
        %550 = vmatpush1.msra.mxu0 0.0
        %551 = vmatprep.mubr.f32.mxu0 0.0
        %552 = vmatmul.mubr.f32.gmra.mrb[0].mxu0 %v485
        %v553 = vpop.f32.mrb[0].mxu0
        %v554 = vadd.f32 %v481, %v553
        %v555 = vpop.f32.mrb[0].mxu0
        %556 = vdwg.mxu0
        %v557 = vmax.f32 %v554, 0.0
        %v559 = vlaneseq
        %v560 = vshrl.u32 %v559, 7
        %v561 = vsub.s32 0, %v560
        %v562 = vrot.slane %v293, %v561
        %vm564 = vcmask 15360
        %v566 = vsel %vm564, %v557, 0
        %v569 = vsel %vm475, %v292, 0
        %571 = vmatprep.subr.mxu0 0.0
        %572 = vmatpush1.msra.mxu0 %v569
        %573 = vmatprep.subr.mxu0 0.0
        %574 = vmatpush1.msra.mxu0 0.0
        %575 = vmatprep.subr.mxu0 0.0
        %576 = vmatpush1.msra.mxu0 0.0
        %577 = vmatprep.subr.mxu0 0.0
        %578 = vmatpush1.msra.mxu0 0.0
        %579 = vmatprep.subr.mxu0 0.0
        %580 = vmatpush1.msra.mxu0 0.0
        %581 = vmatprep.subr.mxu0 0.0
        %582 = vmatpush1.msra.mxu0 0.0
        %583 = vmatprep.subr.mxu0 0.0
        %584 = vmatpush1.msra.mxu0 0.0
        %585 = vmatprep.subr.mxu0 0.0
        %586 = vmatpush1.msra.mxu0 0.0
        %587 = vmatprep.subr.mxu0 0.0
        %588 = vmatpush1.msra.mxu0 0.0
        %589 = vmatprep.subr.mxu0 0.0
        %590 = vmatpush1.msra.mxu0 0.0
        %591 = vmatprep.subr.mxu0 0.0
        %592 = vmatpush1.msra.mxu0 0.0
        %593 = vmatprep.subr.mxu0 0.0
        %594 = vmatpush1.msra.mxu0 0.0
        %595 = vmatprep.subr.mxu0 0.0
        %596 = vmatpush1.msra.mxu0 0.0
        %597 = vmatprep.subr.mxu0 0.0
        %598 = vmatpush1.msra.mxu0 0.0
        %599 = vmatprep.subr.mxu0 0.0
        %600 = vmatpush1.msra.mxu0 0.0
        %601 = vmatprep.subr.mxu0 0.0
        %602 = vmatpush1.msra.mxu0 0.0
        %603 = vmatprep.subr.mxu0 0.0
        %604 = vmatpush1.msra.mxu0 0.0
        %605 = vmatprep.subr.mxu0 0.0
        %606 = vmatpush1.msra.mxu0 0.0
        %607 = vmatprep.subr.mxu0 0.0
        %608 = vmatpush1.msra.mxu0 0.0
        %609 = vmatprep.subr.mxu0 0.0
        %610 = vmatpush1.msra.mxu0 0.0
        %611 = vmatprep.subr.mxu0 0.0
        %612 = vmatpush1.msra.mxu0 0.0
        %613 = vmatprep.subr.mxu0 0.0
        %614 = vmatpush1.msra.mxu0 0.0
        %615 = vmatprep.subr.mxu0 0.0
        %616 = vmatpush1.msra.mxu0 0.0
        %617 = vmatprep.subr.mxu0 0.0
        %618 = vmatpush1.msra.mxu0 0.0
        %619 = vmatprep.subr.mxu0 0.0
        %620 = vmatpush1.msra.mxu0 0.0
        %621 = vmatprep.subr.mxu0 0.0
        %622 = vmatpush1.msra.mxu0 0.0
        %623 = vmatprep.subr.mxu0 0.0
        %624 = vmatpush1.msra.mxu0 0.0
        %625 = vmatprep.subr.mxu0 0.0
        %626 = vmatpush1.msra.mxu0 0.0
        %627 = vmatprep.subr.mxu0 0.0
        %628 = vmatpush1.msra.mxu0 0.0
        %629 = vmatprep.subr.mxu0 0.0
        %630 = vmatpush1.msra.mxu0 0.0
        %631 = vmatprep.subr.mxu0 0.0
        %632 = vmatpush1.msra.mxu0 0.0
        %633 = vmatprep.subr.mxu0 0.0
        %634 = vmatpush1.msra.mxu0 0.0
        %635 = vmatprep.mubr.f32.mxu0 0.0
        %636 = vmatmul.mubr.f32.gmra.mrb[0].mxu0 %v566
        %v637 = vpop.f32.mrb[0].mxu0
        %v638 = vadd.f32 %v562, %v637
        %v639 = vpop.f32.mrb[0].mxu0
        %640 = vdwg.mxu0
        %v642 = vrot.slane %v638, 2
        %v644 = vadd.f32 %v638, %v642
        %v645 = vxor.u32 %v644, 2147483648
        %v646 = vmul.f32 %v645, 1.442695
        %v647 = vpow.pop %v646
        %v648 = vadd.f32 %v647, 1.0
        %v649 = vrcp.pop %v648
        %v650 = vmul.f32 1.0, %v649
        %v651 = vlaneseq
        %v652 = vshrl.u32 %v651, 7
        %v653 = vsub.s32 0, %v652
        %v654 = vrot.slane %v650, %v653
        %656 = vbcast.lane.b32.xlu0 %v654, 256
        %v657 = vpop.permute.xlu0 %656
        %s659 = sor.u32 256, 8
        %660 = vbcast.lane.b32.xlu0 %v654, %s659
        %v661 = vpop.permute.xlu0 %660
        %s663 = sor.u32 256, 16
        %664 = vbcast.lane.b32.xlu0 %v654, %s663
        %v665 = vpop.permute.xlu0 %664
        %s667 = sor.u32 256, 24
        %668 = vbcast.lane.b32.xlu0 %v654, %s667
        %v669 = vpop.permute.xlu0 %668
        %v670 = vlaneseq
        %v671 = vshrl.u32 %v670, 7
        %v672 = vsub.s32 1, %v671
        %v673 = vrot.slane %v650, %v672
        %675 = vbcast.lane.b32.xlu0 %v673, 256
        %v676 = vpop.permute.xlu0 %675
        %s678 = sor.u32 256, 8
        %679 = vbcast.lane.b32.xlu0 %v673, %s678
        %v680 = vpop.permute.xlu0 %679
        %s682 = sor.u32 256, 16
        %683 = vbcast.lane.b32.xlu0 %v673, %s682
        %v684 = vpop.permute.xlu0 %683
        %s686 = sor.u32 256, 24
        %687 = vbcast.lane.b32.xlu0 %v673, %s686
        %v688 = vpop.permute.xlu0 %687
        %v689 = vmul.f32 %v297, %v657
        %v690 = vmul.f32 %v298, %v657
        %v691 = vmul.f32 %v299, %v661
        %v692 = vmul.f32 %v300, %v661
        %v693 = vmul.f32 %v301, %v665
        %v694 = vmul.f32 %v302, %v665
        %v695 = vmul.f32 %v303, %v669
        %v696 = vmul.f32 %v304, %v669
        %v697 = vmul.f32 %v305, %v676
        %v698 = vmul.f32 %v306, %v676
        %v699 = vmul.f32 %v307, %v680
        %v700 = vmul.f32 %v308, %v680
        %v701 = vmul.f32 %v309, %v684
        %v702 = vmul.f32 %v310, %v684
        %v703 = vmul.f32 %v311, %v688
        %v704 = vmul.f32 %v312, %v688
        %v705 = vadd.f32 %v689, %v691
        %v706 = vadd.f32 %v705, %v693
        %v707 = vadd.f32 %v706, %v695
        %v708 = vrot.slane %v707, 4
        %v709 = vadd.f32 %v707, %v708
        %v710 = vrot.slane %v709, 2
        %v711 = vadd.f32 %v709, %v710
        %v712 = vrot.slane %v711, 1
        %v713 = vadd.f32 %v711, %v712
        %v714 = vadd.f32 %v690, %v692
        %v715 = vadd.f32 %v714, %v694
        %v716 = vadd.f32 %v715, %v696
        %v717 = vrot.slane %v716, 4
        %v718 = vadd.f32 %v716, %v717
        %v719 = vrot.slane %v718, 2
        %v720 = vadd.f32 %v718, %v719
        %v721 = vrot.slane %v720, 1
        %v722 = vadd.f32 %v720, %v721
        %v723 = vadd.f32 %v697, %v699
        %v724 = vadd.f32 %v723, %v701
        %v725 = vadd.f32 %v724, %v703
        %v726 = vrot.slane %v725, 4
        %v727 = vadd.f32 %v725, %v726
        %v728 = vrot.slane %v727, 2
        %v729 = vadd.f32 %v727, %v728
        %v730 = vrot.slane %v729, 1
        %v731 = vadd.f32 %v729, %v730
        %v732 = vadd.f32 %v698, %v700
        %v733 = vadd.f32 %v732, %v702
        %v734 = vadd.f32 %v733, %v704
        %v735 = vrot.slane %v734, 4
        %v736 = vadd.f32 %v734, %v735
        %v737 = vrot.slane %v736, 2
        %v738 = vadd.f32 %v736, %v737
        %v739 = vrot.slane %v738, 1
        %v740 = vadd.f32 %v738, %v739
        %v741 = vmul.f32 %v713, 0.03125
        %v742 = vmul.f32 %v722, 0.03125
        %v743 = vmul.f32 %v731, 0.03125
        %v744 = vmul.f32 %v740, 0.03125
        %v745 = vmax.f32 %v689, %v691
        %v746 = vmax.f32 %v745, %v693
        %v747 = vmax.f32 %v746, %v695
        %v748 = vrot.slane %v747, 4
        %v749 = vmax.f32 %v747, %v748
        %v750 = vrot.slane %v749, 2
        %v751 = vmax.f32 %v749, %v750
        %v752 = vrot.slane %v751, 1
        %v753 = vmax.f32 %v751, %v752
        %v754 = vmax.f32 %v690, %v692
        %v755 = vmax.f32 %v754, %v694
        %v756 = vmax.f32 %v755, %v696
        %v757 = vrot.slane %v756, 4
        %v758 = vmax.f32 %v756, %v757
        %v759 = vrot.slane %v758, 2
        %v760 = vmax.f32 %v758, %v759
        %v761 = vrot.slane %v760, 1
        %v762 = vmax.f32 %v760, %v761
        %v763 = vmax.f32 %v697, %v699
        %v764 = vmax.f32 %v763, %v701
        %v765 = vmax.f32 %v764, %v703
        %v766 = vrot.slane %v765, 4
        %v767 = vmax.f32 %v765, %v766
        %v768 = vrot.slane %v767, 2
        %v769 = vmax.f32 %v767, %v768
        %v770 = vrot.slane %v769, 1
        %v771 = vmax.f32 %v769, %v770
        %v772 = vmax.f32 %v698, %v700
        %v773 = vmax.f32 %v772, %v702
        %v774 = vmax.f32 %v773, %v704
        %v775 = vrot.slane %v774, 4
        %v776 = vmax.f32 %v774, %v775
        %v777 = vrot.slane %v776, 2
        %v778 = vmax.f32 %v776, %v777
        %v779 = vrot.slane %v778, 1
        %v780 = vmax.f32 %v778, %v779
        %v781 = vadd.s32 %v378, 128
        %s782 = sld [smem:[#allocation6 + $0x3]]
        %v783 = vstv %s782
        %v784 = vmul.f32 %v783, %v741
        %v785 = vmul.f32 %v783, %v742
        %v786 = vmul.f32 %v783, %v743
        %v787 = vmul.f32 %v783, %v744
        %v788 = vstv %s294
        %v789 = vadd.f32 %v788, %v784
        %v790 = vadd.f32 %v788, %v785
        %v791 = vadd.f32 %v788, %v786
        %v792 = vadd.f32 %v788, %v787
        %s793 = sld [smem:[#allocation6 + $0xa]]
        %v794 = vstv %s793
        %v795 = vmul.f32 %v794, %v753
        %v796 = vmul.f32 %v794, %v762
        %v797 = vmul.f32 %v794, %v771
        %v798 = vmul.f32 %v794, %v780
        %v799 = vadd.f32 %v789, %v795
        %v800 = vadd.f32 %v790, %v796
        %v801 = vadd.f32 %v791, %v797
        %v802 = vadd.f32 %v792, %v798
        %s803 = sld [smem:[#allocation6]]
        %v808 = vsel %vm423, %v743, %v741
        %v809 = vsel %vm423, %v744, %v742
        %812 = vrot.lane.b32.xlu0 %v808, 3
        %v813 = vpop.permute.xlu0 %812
        %814 = vrot.lane.b32.xlu0 %v809, 3
        %v815 = vpop.permute.xlu0 %814
        %vm816 = vcmp.lt.s32.totalorder %v378, 3
        %v817 = vsel %vm816, %v813, %v815
        %v818 = vsel %vm816, %v815, %v813
        %vm819 = vcmp.ge.s32.totalorder %v378, 3
        %vm820 = vcmp.ge.s32.totalorder %v781, 3
        %v821 = vsel %vm819, 1, 0
        %v822 = vsel %vm820, 1, 0
        %vm823 = vcmp.eq.s32.totalorder %v821, 1
        %vm824 = vcmp.eq.s32.totalorder %v822, 1
        %v825 = vsel %vm823, %v818, 0.0
        %v826 = vsel %vm824, %v817, 0.0
        %v827 = vstv %s803
        %v828 = vmul.f32 %v827, %v825
        %v829 = vmul.f32 %v827, %v826
        %v832 = vrot.slane %v828, 1
        %v833 = vrot.slane %v829, 1
        %v838 = vadd.f32 %v799, %v828
        %v839 = vadd.f32 %v800, %v829
        %v840 = vadd.f32 %v801, %v832
        %v841 = vadd.f32 %v802, %v833
        %s842 = sld [smem:[#allocation6 + $0x7]]
        %v847 = vsel %vm423, %v771, %v753
        %v848 = vsel %vm423, %v780, %v762
        %851 = vrot.lane.b32.xlu0 %v847, 3
        %v852 = vpop.permute.xlu0 %851
        %853 = vrot.lane.b32.xlu0 %v848, 3
        %v854 = vpop.permute.xlu0 %853
        %v855 = vsel %vm816, %v852, %v854
        %v856 = vsel %vm816, %v854, %v852
        %v857 = vsel %vm823, %v856, 0.0
        %v858 = vsel %vm824, %v855, 0.0
        %v859 = vstv %s842
        %v860 = vmul.f32 %v859, %v857
        %v861 = vmul.f32 %v859, %v858
        %v864 = vrot.slane %v860, 1
        %v865 = vrot.slane %v861, 1
        %v870 = vadd.f32 %v838, %v860
        %v871 = vadd.f32 %v839, %v861
        %v872 = vadd.f32 %v840, %v864
        %v873 = vadd.f32 %v841, %v865
        %s874 = sld [smem:[#allocation6 + $0x1]]
        %875 = vrot.lane.b32.xlu0 %v808, 2
        %v876 = vpop.permute.xlu0 %875
        %877 = vrot.lane.b32.xlu0 %v809, 2
        %v878 = vpop.permute.xlu0 %877
        %vm879 = vcmp.lt.s32.totalorder %v378, 2
        %v880 = vsel %vm879, %v876, %v878
        %v881 = vsel %vm879, %v878, %v876
        %vm882 = vcmp.ge.s32.totalorder %v378, 2
        %vm883 = vcmp.ge.s32.totalorder %v781, 2
        %v884 = vsel %vm882, 1, 0
        %v885 = vsel %vm883, 1, 0
        %vm886 = vcmp.eq.s32.totalorder %v884, 1
        %vm887 = vcmp.eq.s32.totalorder %v885, 1
        %v888 = vsel %vm886, %v881, 0.0
        %v889 = vsel %vm887, %v880, 0.0
        %v890 = vstv %s874
        %v891 = vmul.f32 %v890, %v888
        %v892 = vmul.f32 %v890, %v889
        %v895 = vrot.slane %v891, 1
        %v896 = vrot.slane %v892, 1
        %v901 = vadd.f32 %v870, %v891
        %v902 = vadd.f32 %v871, %v892
        %v903 = vadd.f32 %v872, %v895
        %v904 = vadd.f32 %v873, %v896
        %s905 = sld [smem:[#allocation6 + $0x8]]
        %906 = vrot.lane.b32.xlu0 %v847, 2
        %v907 = vpop.permute.xlu0 %906
        %908 = vrot.lane.b32.xlu0 %v848, 2
        %v909 = vpop.permute.xlu0 %908
        %v910 = vsel %vm879, %v907, %v909
        %v911 = vsel %vm879, %v909, %v907
        %v912 = vsel %vm886, %v911, 0.0
        %v913 = vsel %vm887, %v910, 0.0
        %v914 = vstv %s905
        %v915 = vmul.f32 %v914, %v912
        %v916 = vmul.f32 %v914, %v913
        %v919 = vrot.slane %v915, 1
        %v920 = vrot.slane %v916, 1
        %v925 = vadd.f32 %v901, %v915
        %v926 = vadd.f32 %v902, %v916
        %v927 = vadd.f32 %v903, %v919
        %v928 = vadd.f32 %v904, %v920
        %s929 = sld [smem:[#allocation6 + $0x2]]
        %930 = vrot.lane.b32.xlu0 %v808, 1
        %v931 = vpop.permute.xlu0 %930
        %932 = vrot.lane.b32.xlu0 %v809, 1
        %v933 = vpop.permute.xlu0 %932
        %vm934 = vcmp.lt.s32.totalorder %v378, 1
        %v935 = vsel %vm934, %v931, %v933
        %v936 = vsel %vm934, %v933, %v931
        %vm937 = vcmp.ge.s32.totalorder %v378, 1
        %vm938 = vcmp.ge.s32.totalorder %v781, 1
        %v939 = vsel %vm937, 1, 0
        %v940 = vsel %vm938, 1, 0
        %vm941 = vcmp.eq.s32.totalorder %v939, 1
        %vm942 = vcmp.eq.s32.totalorder %v940, 1
        %v943 = vsel %vm941, %v936, 0.0
        %v944 = vsel %vm942, %v935, 0.0
        %v945 = vstv %s929
        %v946 = vmul.f32 %v945, %v943
        %v947 = vmul.f32 %v945, %v944
        %v950 = vrot.slane %v946, 1
        %v951 = vrot.slane %v947, 1
        %v956 = vadd.f32 %v925, %v946
        %v957 = vadd.f32 %v926, %v947
        %v958 = vadd.f32 %v927, %v950
        %v959 = vadd.f32 %v928, %v951
        %s960 = sld [smem:[#allocation6 + $0x9]]
        %961 = vrot.lane.b32.xlu0 %v847, 1
        %v962 = vpop.permute.xlu0 %961
        %963 = vrot.lane.b32.xlu0 %v848, 1
        %v964 = vpop.permute.xlu0 %963
        %v965 = vsel %vm934, %v962, %v964
        %v966 = vsel %vm934, %v964, %v962
        %v967 = vsel %vm941, %v966, 0.0
        %v968 = vsel %vm942, %v965, 0.0
        %v969 = vstv %s960
        %v970 = vmul.f32 %v969, %v967
        %v971 = vmul.f32 %v969, %v968
        %v974 = vrot.slane %v970, 1
        %v975 = vrot.slane %v971, 1
        %v980 = vadd.f32 %v956, %v970
        %v981 = vadd.f32 %v957, %v971
        %v982 = vadd.f32 %v958, %v974
        %v983 = vadd.f32 %v959, %v975
        %s984 = sld [smem:[#allocation6 + $0x4]]
        %985 = vrot.lane.b32.xlu0 %v808, 127
        %v986 = vpop.permute.xlu0 %985
        %987 = vrot.lane.b32.xlu0 %v809, 127
        %v988 = vpop.permute.xlu0 %987
        %vm989 = vcmp.lt.s32.totalorder %v378, 127
        %v990 = vsel %vm989, %v986, %v988
        %v991 = vsel %vm989, %v988, %v986
        %vm992 = vcmp.lt.s32.totalorder %v378, 255
        %vm993 = vcmp.lt.s32.totalorder %v781, 255
        %v994 = vsel %vm992, 1, 0
        %v995 = vsel %vm993, 1, 0
        %vm996 = vcmp.eq.s32.totalorder %v994, 1
        %vm997 = vcmp.eq.s32.totalorder %v995, 1
        %v998 = vsel %vm996, %v990, 0.0
        %v999 = vsel %vm997, %v991, 0.0
        %v1000 = vstv %s984
        %v1001 = vmul.f32 %v1000, %v998
        %v1002 = vmul.f32 %v1000, %v999
        %v1005 = vrot.slane %v1001, 1
        %v1006 = vrot.slane %v1002, 1
        %v1011 = vadd.f32 %v980, %v1001
        %v1012 = vadd.f32 %v981, %v1002
        %v1013 = vadd.f32 %v982, %v1005
        %v1014 = vadd.f32 %v983, %v1006
        %s1015 = sld [smem:[#allocation6 + $0xb]]
        %1016 = vrot.lane.b32.xlu0 %v847, 127
        %v1017 = vpop.permute.xlu0 %1016
        %1018 = vrot.lane.b32.xlu0 %v848, 127
        %v1019 = vpop.permute.xlu0 %1018
        %v1020 = vsel %vm989, %v1017, %v1019
        %v1021 = vsel %vm989, %v1019, %v1017
        %v1022 = vsel %vm996, %v1020, 0.0
        %v1023 = vsel %vm997, %v1021, 0.0
        %v1024 = vstv %s1015
        %v1025 = vmul.f32 %v1024, %v1022
        %v1026 = vmul.f32 %v1024, %v1023
        %v1029 = vrot.slane %v1025, 1
        %v1030 = vrot.slane %v1026, 1
        %v1035 = vadd.f32 %v1011, %v1025
        %v1036 = vadd.f32 %v1012, %v1026
        %v1037 = vadd.f32 %v1013, %v1029
        %v1038 = vadd.f32 %v1014, %v1030
        %s1039 = sld [smem:[#allocation6 + $0x5]]
        %1040 = vrot.lane.b32.xlu0 %v808, 126
        %v1041 = vpop.permute.xlu0 %1040
        %1042 = vrot.lane.b32.xlu0 %v809, 126
        %v1043 = vpop.permute.xlu0 %1042
        %vm1044 = vcmp.lt.s32.totalorder %v378, 126
        %v1045 = vsel %vm1044, %v1041, %v1043
        %v1046 = vsel %vm1044, %v1043, %v1041
        %vm1047 = vcmp.lt.s32.totalorder %v378, 254
        %vm1048 = vcmp.lt.s32.totalorder %v781, 254
        %v1049 = vsel %vm1047, 1, 0
        %v1050 = vsel %vm1048, 1, 0
        %vm1051 = vcmp.eq.s32.totalorder %v1049, 1
        %vm1052 = vcmp.eq.s32.totalorder %v1050, 1
        %v1053 = vsel %vm1051, %v1045, 0.0
        %v1054 = vsel %vm1052, %v1046, 0.0
        %v1055 = vstv %s1039
        %v1056 = vmul.f32 %v1055, %v1053
        %v1057 = vmul.f32 %v1055, %v1054
        %v1060 = vrot.slane %v1056, 1
        %v1061 = vrot.slane %v1057, 1
        %v1066 = vadd.f32 %v1035, %v1056
        %v1067 = vadd.f32 %v1036, %v1057
        %v1068 = vadd.f32 %v1037, %v1060
        %v1069 = vadd.f32 %v1038, %v1061
        %s1070 = sld [smem:[#allocation6 + $0xc]]
        %1071 = vrot.lane.b32.xlu0 %v847, 126
        %v1072 = vpop.permute.xlu0 %1071
        %1073 = vrot.lane.b32.xlu0 %v848, 126
        %v1074 = vpop.permute.xlu0 %1073
        %v1075 = vsel %vm1044, %v1072, %v1074
        %v1076 = vsel %vm1044, %v1074, %v1072
        %v1077 = vsel %vm1051, %v1075, 0.0
        %v1078 = vsel %vm1052, %v1076, 0.0
        %v1079 = vstv %s1070
        %v1080 = vmul.f32 %v1079, %v1077
        %v1081 = vmul.f32 %v1079, %v1078
        %v1084 = vrot.slane %v1080, 1
        %v1085 = vrot.slane %v1081, 1
        %v1090 = vadd.f32 %v1066, %v1080
        %v1091 = vadd.f32 %v1067, %v1081
        %v1092 = vadd.f32 %v1068, %v1084
        %v1093 = vadd.f32 %v1069, %v1085
        %s1094 = sld [smem:[#allocation6 + $0x6]]
        %1095 = vrot.lane.b32.xlu0 %v808, 125
        %v1096 = vpop.permute.xlu0 %1095
        %1097 = vrot.lane.b32.xlu0 %v809, 125
        %v1098 = vpop.permute.xlu0 %1097
        %vm1099 = vcmp.lt.s32.totalorder %v378, 125
        %v1100 = vsel %vm1099, %v1096, %v1098
        %v1101 = vsel %vm1099, %v1098, %v1096
        %vm1102 = vcmp.lt.s32.totalorder %v378, 253
        %vm1103 = vcmp.lt.s32.totalorder %v781, 253
        %v1104 = vsel %vm1102, 1, 0
        %v1105 = vsel %vm1103, 1, 0
        %vm1106 = vcmp.eq.s32.totalorder %v1104, 1
        %vm1107 = vcmp.eq.s32.totalorder %v1105, 1
        %v1108 = vsel %vm1106, %v1100, 0.0
        %v1109 = vsel %vm1107, %v1101, 0.0
        %v1110 = vstv %s1094
        %v1111 = vmul.f32 %v1110, %v1108
        %v1112 = vmul.f32 %v1110, %v1109
        %v1115 = vrot.slane %v1111, 1
        %v1116 = vrot.slane %v1112, 1
        %v1121 = vadd.f32 %v1090, %v1111
        %v1122 = vadd.f32 %v1091, %v1112
        %v1123 = vadd.f32 %v1092, %v1115
        %v1124 = vadd.f32 %v1093, %v1116
        %s1125 = sld [smem:[#allocation6 + $0xd]]
        %1126 = vrot.lane.b32.xlu0 %v847, 125
        %v1127 = vpop.permute.xlu0 %1126
        %1128 = vrot.lane.b32.xlu0 %v848, 125
        %v1129 = vpop.permute.xlu0 %1128
        %v1130 = vsel %vm1099, %v1127, %v1129
        %v1131 = vsel %vm1099, %v1129, %v1127
        %v1132 = vsel %vm1106, %v1130, 0.0
        %v1133 = vsel %vm1107, %v1131, 0.0
        %v1134 = vstv %s1125
        %v1135 = vmul.f32 %v1134, %v1132
        %v1136 = vmul.f32 %v1134, %v1133
        %v1139 = vrot.slane %v1135, 1
        %v1140 = vrot.slane %v1136, 1
        %v1145 = vadd.f32 %v1121, %v1135
        %v1146 = vadd.f32 %v1122, %v1136
        %v1147 = vadd.f32 %v1123, %v1139
        %v1148 = vadd.f32 %v1124, %v1140
        %v1149 = vmax.f32 %v1145, 0.0
        %v1150 = vmax.f32 %v1146, 0.0
        %v1151 = vmax.f32 %v1147, 0.0
        %v1152 = vmax.f32 %v1148, 0.0
        %v1153 = vstv %s295
        %v1154 = vmul.f32 %v1149, %v1153
        %v1155 = vmul.f32 %v1150, %v1153
        %v1156 = vmul.f32 %v1151, %v1153
        %v1157 = vmul.f32 %v1152, %v1153
        %v1158 = vstv %s296
        %v1159 = vadd.f32 %v1154, %v1158
        %v1160 = vadd.f32 %v1155, %v1158
        %v1161 = vadd.f32 %v1156, %v1158
        %v1162 = vadd.f32 %v1157, %v1158
        %v1163 = vxor.u32 %v1159, 2147483648
        %v1164 = vxor.u32 %v1160, 2147483648
        %v1165 = vxor.u32 %v1161, 2147483648
        %v1166 = vxor.u32 %v1162, 2147483648
        %v1167 = vmul.f32 %v1163, 1.442695
        %v1168 = vpow.pop %v1167
        %v1169 = vmul.f32 %v1164, 1.442695
        %v1170 = vpow.pop %v1169
        %v1171 = vmul.f32 %v1165, 1.442695
        %v1172 = vpow.pop %v1171
        %v1173 = vmul.f32 %v1166, 1.442695
        %v1174 = vpow.pop %v1173
        %v1175 = vadd.f32 %v1168, 1.0
        %v1176 = vadd.f32 %v1170, 1.0
        %v1177 = vadd.f32 %v1172, 1.0
        %v1178 = vadd.f32 %v1174, 1.0
        %v1179 = vrcp.pop %v1175
        %v1180 = vmul.f32 1.0, %v1179
        %v1181 = vrcp.pop %v1176
        %v1182 = vmul.f32 1.0, %v1181
        %v1183 = vrcp.pop %v1177
        %v1184 = vmul.f32 1.0, %v1183
        %v1185 = vrcp.pop %v1178
        %v1186 = vmul.f32 1.0, %v1185
        %v1187 = vlaneseq
        %v1188 = vshrl.u32 %v1187, 7
        %v1189 = vsub.s32 0, %v1188
        %v1190 = vrot.slane %v1180, %v1189
        %v1191 = vlaneseq
        %v1192 = vshrl.u32 %v1191, 7
        %v1193 = vsub.s32 0, %v1192
        %v1194 = vrot.slane %v1182, %v1193
        %v1195 = vlaneseq
        %v1196 = vshrl.u32 %v1195, 7
        %v1197 = vsub.s32 0, %v1196
        %v1198 = vrot.slane %v1184, %v1197
        %v1199 = vlaneseq
        %v1200 = vshrl.u32 %v1199, 7
        %v1201 = vsub.s32 0, %v1200
        %v1202 = vrot.slane %v1186, %v1201
        %v1203 = vmul.f32 %v689, %v1190
        %v1204 = vmul.f32 %v690, %v1194
        %v1205 = vmul.f32 %v691, %v1190
        %v1206 = vmul.f32 %v692, %v1194
        %v1207 = vmul.f32 %v693, %v1190
        %v1208 = vmul.f32 %v694, %v1194
        %v1209 = vmul.f32 %v695, %v1190
        %v1210 = vmul.f32 %v696, %v1194
        %v1211 = vmul.f32 %v697, %v1198
        %v1212 = vmul.f32 %v698, %v1202
        %v1213 = vmul.f32 %v699, %v1198
        %v1214 = vmul.f32 %v700, %v1202
        %v1215 = vmul.f32 %v701, %v1198
        %v1216 = vmul.f32 %v702, %v1202
        %v1217 = vmul.f32 %v703, %v1198
        %v1218 = vmul.f32 %v704, %v1202
        %1219 = vst [vmem:[%s284] sm:$0xff] %v1203
        %1220 = vst [vmem:[%s284 + $0x8] sm:$0xff] %v1204
        %1221 = vst [vmem:[%s284 + $0x10] sm:$0xff] %v1205
        %1222 = vst [vmem:[%s284 + $0x18] sm:$0xff] %v1206
        %1223 = vst [vmem:[%s284 + $0x20] sm:$0xff] %v1207
        %1224 = vst [vmem:[%s284 + $0x28] sm:$0xff] %v1208
        %1225 = vst [vmem:[%s284 + $0x30] sm:$0xff] %v1209
        %1226 = vst [vmem:[%s284 + $0x38] sm:$0xff] %v1210
        %1227 = vst [vmem:[%s284 + $0x40] sm:$0xff] %v1211
        %1228 = vst [vmem:[%s284 + $0x48] sm:$0xff] %v1212
        %1229 = vst [vmem:[%s284 + $0x50] sm:$0xff] %v1213
        %1230 = vst [vmem:[%s284 + $0x58] sm:$0xff] %v1214
        %1231 = vst [vmem:[%s284 + $0x60] sm:$0xff] %v1215
        %1232 = vst [vmem:[%s284 + $0x68] sm:$0xff] %v1216
        %1233 = vst [vmem:[%s284 + $0x70] sm:$0xff] %v1217
        %1234 = vst [vmem:[%s284 + $0x78] sm:$0xff] %v1218
        %s1235 = sand.u32 %s163, 1
        %s1236 = scalar_lea.sflag [#allocation4], %s1235
        %s1237 = sand.u32 %s163, 1
        %s1238 = smul.addr %s1237, 128
        %s1239 = scalar_lea.vmem [#allocation7], %s1238
        // Predicated region
        $region53: #{tpu_custom_call.1} parent=43 // pred_check
          %p1240 = pneg %p173
        $region54: #{tpu_custom_call.1} parent=43 // pred_check_branch
          %1242 = sbr.rel (%p1240) target = $region56
        $region55: #{tpu_custom_call.1} parent=43 // pred_region
          %s1243 = smul.u32 2, %s24
          %s1245 = ssub.s32 2048, 2048
          %1246 = vsyncadd %s1236, %s1245
          %s1247 = smul.addr %s1243, 8
          %s1248 = smul.addr %s1247, 128
          %s1249 = scalar_lea.hbm %s6, %s1248
          %s1250 = sshll.u32 %s1239, 4
          %s1251 = int_to_ptr.vmem [resolvable:$true] %s1250
          %1256 = dma.vmem_to_hbm [thread:$0]  %s1251, 2048, %s1249, %s1236, 256, 256, 16
        $region56: #{tpu_custom_call.1} parent=43 // pred_fallthru
          _
      $region44: #{tpu_custom_call.1} parent=5 // pred_fallthru
        _
      %p1257 = scmp.le.s32.totalorder 2, %s19
      // Predicated region
      $region57: #{tpu_custom_call.1} parent=5 // pred_check
        %p1258 = pneg %p1257
      $region58: #{tpu_custom_call.1} parent=5 // pred_check_branch
        %1260 = sbr.rel (%p1258) target = $region60
      $region59: #{tpu_custom_call.1} parent=5 // pred_region
        %s1261 = ssub.s32 %s19, 2
        // Predicated region
        $region61: #{tpu_custom_call.1} parent=59 // pred_check
          %p1262 = pneg %p179
        $region62: #{tpu_custom_call.1} parent=59 // pred_check_branch
          %1264 = sbr.rel (%p1262) target = $region64
        $region63: #{tpu_custom_call.1} parent=59 // pred_region
          %s1265 = sand.u32 %s164, 1
          %s1266 = scalar_lea.sflag [#allocation4], %s1265
          %s1267 = sand.u32 %s164, 1
          %s1268 = smul.addr %s1267, 128
          %s1269 = scalar_lea.vmem [#allocation7], %s1268
          %1270 = dma.done %s1266, 2048
        $region64: #{tpu_custom_call.1} parent=59 // pred_fallthru
          _
      $region60: #{tpu_custom_call.1} parent=5 // pred_fallthru
        _
    $region6: #{tpu_custom_call.1} parent=1 // loop_footer
      %s23 = sadd.s32 1, %s19
    $region7: #{tpu_custom_call.1} parent=1 // loop_footer_branch
      %18 = sbr.rel target = $region3
    $region8: #{tpu_custom_call.1} parent=1 // loop_exit
      _
    %1271 = vsyncpa [#allocation3], 1
    %s1272 = scalar_lea.sflag [#allocation3], 1
    %1273 = vsyncpa %s1272, 1
    %1274 = vsyncpa [#allocation4], 1
    %s1275 = scalar_lea.sflag [#allocation4], 1
    %1276 = vsyncpa %s1275, 1
    %1277 = vsyncpa [#allocation5], 1
    %s1278 = scalar_lea.sflag [#allocation5], 1
    %1279 = vsyncpa %s1278, 1

</llo_original>
